<compile_context>
chip_gen: v5e
topology: v5e:2x2
jax: 0.10.0
libtpu: 0.0.40
codegen_flags: <defaults>
</compile_context>

<pallas_src>
import jax
import jax.numpy as jnp
from jax import lax
from jax.experimental import pallas as pl
from jax.experimental.pallas import tpu as pltpu

HIDDEN = 128    # TextSubNet hidden size (fixed in the module: TextSubNet(audio_in, 128, 64))
OUT1 = 64       # TextSubNet out size
OUT2 = 3        # mylinear output
OUT_PAD = 128   # lane-dense padding of the tail / output (wrapper slices [:, :3])


def _lstm_head_kernel(lens_ref, x_ref, w_ih_ref, w_hh_ref, b_ref, wt_ref, bt_ref,
                      out_ref, gates_ref):
    """Variable-length LSTM + fused tail linear, single program.

    lens_ref  : (Bp, 1)   int32  valid length per (padded) sequence; padded rows = 0
    x_ref     : (T*Bp, D) bf16   time-major flattened audio (rows t*Bp..t*Bp+Bp-1 = step t)
    w_ih_ref  : (D, 4H)   bf16   input->gates weight, columns ordered (i, f, o, g)
    w_hh_ref  : (H, 4H)   bf16   hidden->gates weight, same column order
    b_ref     : (1, 4H)   f32    combined bias b_ih + b_hh, same column order
    wt_ref    : (H, 128)  f32    fused tail weight W1ᵀ W2ᵀ, zero-padded to 128 lanes
    bt_ref    : (1, 128)  f32    fused tail bias b1 W2ᵀ + b2, zero-padded
    out_ref   : (Bp, 128) f32    lane-dense output; columns [0,3) are the real logits
    gates_ref : (T*Bp, 4H) f32   VMEM scratch holding the hoisted input projection
    """
    Bp = out_ref.shape[0]
    H = HIDDEN
    T = gates_ref.shape[0] // Bp

    # Hoisted input projection: one big bf16 MXU matmul (f32 accumulate), off the
    # recurrence's critical path. Parked in VMEM scratch to keep vregs for the h/c chain.
    gates_ref[...] = (jnp.dot(x_ref[...], w_ih_ref[...],
                              preferred_element_type=jnp.float32) + b_ref[...])

    w_hh = w_hh_ref[...]                                      # (H, 4H) bf16, resident
    lens = lens_ref[...]                                      # (Bp, 1) int32

    # pack_padded_sequence semantics: h/c freeze once t >= length[b].
    # NOTE: assumes lengths >= 1 (PyTorch's pack_padded_sequence rejects zero lengths).
    # Precomputed once (one iota + one compare) instead of a compare per step.
    masks = lax.broadcasted_iota(jnp.int32, (Bp, T), 1) < lens   # (Bp, T) bool

    h = jnp.zeros((Bp, H), jnp.float32)
    c = jnp.zeros((Bp, H), jnp.float32)

    # T is static and small: fully unroll the recurrence. Only the bf16 h @ W_hh dot
    # remains on the serial dependency chain; gate slices are aligned 8-row VMEM loads.
    for t in range(T):
        g = (gates_ref[t * Bp:(t + 1) * Bp, :]
             + jnp.dot(h.astype(jnp.bfloat16), w_hh,
                       preferred_element_type=jnp.float32))
        sig = jax.nn.sigmoid(g[:, :3 * H])                    # (i, f, o) in one EUP batch
        i_g = sig[:, 0:H]
        f_g = sig[:, H:2 * H]
        o_g = sig[:, 2 * H:3 * H]
        g_g = jnp.tanh(g[:, 3 * H:])                          # g gate
        c_new = f_g * c + i_g * g_g
        h_new = o_g * jnp.tanh(c_new)
        m = masks[:, t:t + 1]                                 # (Bp, 1), broadcasts over H
        c = jnp.where(m, c_new, c)
        h = jnp.where(m, h_new, h)

    # Dropout(0.2) is identity at inference; linear_1 and mylinear are fused into one
    # matmul (valid: TextSubNet has no activation after linear_1). Lane-dense store.
    out_ref[...] = (jnp.dot(h, wt_ref[...], preferred_element_type=jnp.float32)
                    + bt_ref[...])


def test1_forward(audio, audio_lengths, kernel_params):
    """audio: (B, T, D) float32 ; audio_lengths: (B,) int ; returns {'M': (B, 3)}."""
    B, T, D = audio.shape
    w_ih, w_hh, b, w_tail, b_tail = kernel_params

    # Pad batch to a sublane multiple (free: vregs are 8x128 anyway) so all per-step gate
    # slices are aligned; padded rows get length 0 and stay at zero state.
    Bp = ((B + 7) // 8) * 8
    audio_p = jnp.zeros((Bp, T, D), jnp.float32).at[:B].set(audio.astype(jnp.float32))
    # Time-major, flattened, bf16 (halves the input DMA; matmul accumulates in f32).
    x2d = jnp.transpose(audio_p, (1, 0, 2)).reshape(T * Bp, D).astype(jnp.bfloat16)
    lens = jnp.zeros((Bp, 1), jnp.int32).at[:B, 0].set(audio_lengths.astype(jnp.int32))

    vmem = pl.BlockSpec(memory_space=pltpu.MemorySpace.VMEM)
    out = pl.pallas_call(
        _lstm_head_kernel,
        out_shape=jax.ShapeDtypeStruct((Bp, OUT_PAD), jnp.float32),
        in_specs=[vmem] * 7,
        out_specs=vmem,
        scratch_shapes=[pltpu.VMEM((T * Bp, 4 * HIDDEN), jnp.float32)],
    )(lens, x2d, w_ih, w_hh, b, w_tail, b_tail)
    return {"M": out[:B, :OUT2]}


def init_torch_like_params(key, audio_in):
    """Deterministic synthetic parameters laid out exactly like the PyTorch module."""
    ks = jax.random.split(key, 8)
    s = 0.1
    # nn.LSTM(audio_in, 128): weight_ih_l0 (4H, D), weight_hh_l0 (4H, H), gate rows (i,f,g,o)
    w_ih = s * jax.random.normal(ks[0], (4 * HIDDEN, audio_in), jnp.float32)
    w_hh = s * jax.random.normal(ks[1], (4 * HIDDEN, HIDDEN), jnp.float32)
    b_ih = s * jax.random.normal(ks[2], (4 * HIDDEN,), jnp.float32)
    b_hh = s * jax.random.normal(ks[3], (4 * HIDDEN,), jnp.float32)
    # TextSubNet.linear_1: Linear(128, 64) -> weight (64, 128)
    w1 = s * jax.random.normal(ks[4], (OUT1, HIDDEN), jnp.float32)
    b1 = s * jax.random.normal(ks[5], (OUT1,), jnp.float32)
    # mylinear: Linear(64, 3) -> weight (3, 64)
    w2 = s * jax.random.normal(ks[6], (OUT2, OUT1), jnp.float32)
    b2 = s * jax.random.normal(ks[7], (OUT2,), jnp.float32)
    return (w_ih, w_hh, b_ih, b_hh, w1, b1, w2, b2)


def prepare_kernel_params(torch_params):
    """PyTorch-layout params -> kernel layout (gate reorder, transpose, bf16 cast,
    tail fusion + lane-dense padding)."""
    w_ih, w_hh, b_ih, b_hh, w1, b1, w2, b2 = torch_params
    H = HIDDEN
    # PyTorch gate order is (i, f, g, o); regroup to (i, f, o | g) so one sigmoid covers 3H.
    order = jnp.concatenate([
        jnp.arange(0 * H, 1 * H), jnp.arange(1 * H, 2 * H),
        jnp.arange(3 * H, 4 * H), jnp.arange(2 * H, 3 * H)])
    w_ih_k = jnp.transpose(w_ih[order]).astype(jnp.bfloat16)     # (D, 4H) bf16
    w_hh_k = jnp.transpose(w_hh[order]).astype(jnp.bfloat16)     # (H, 4H) bf16
    b_k = (b_ih + b_hh)[order].reshape(1, 4 * H)                 # combined bias, f32
    # Fuse linear_1 (128->64) and mylinear (64->3): no activation between them at inference.
    w_tail = jnp.transpose(w1) @ jnp.transpose(w2)               # (128, 3) f32
    b_tail = b1 @ jnp.transpose(w2) + b2                         # (3,) f32
    # Zero-pad the 3-wide tail to 128 lanes so the kernel's output store is lane-dense.
    w_tail_p = jnp.zeros((H, OUT_PAD), jnp.float32).at[:, :OUT2].set(w_tail)
    b_tail_p = jnp.zeros((1, OUT_PAD), jnp.float32).at[0, :OUT2].set(b_tail)
    return (w_ih_k, w_hh_k, b_k, w_tail_p, b_tail_p)


def test1_reference(audio, audio_lengths, torch_params):
    """Pure-JAX f32 reference with PyTorch layout/semantics, for a correctness check."""
    w_ih, w_hh, b_ih, b_hh, w1, b1, w2, b2 = torch_params
    B, T, D = audio.shape
    H = HIDDEN

    def cell(carry, x_t):
        h, c = carry
        g = x_t @ w_ih.T + b_ih + h @ w_hh.T + b_hh
        i = jax.nn.sigmoid(g[:, 0 * H:1 * H])
        f = jax.nn.sigmoid(g[:, 1 * H:2 * H])
        gg = jnp.tanh(g[:, 2 * H:3 * H])
        o = jax.nn.sigmoid(g[:, 3 * H:4 * H])
        c_new = f * c + i * gg
        h_new = o * jnp.tanh(c_new)
        return (h_new, c_new), h_new

    x_tm = jnp.transpose(audio, (1, 0, 2)).astype(jnp.float32)
    init = (jnp.zeros((B, H), jnp.float32), jnp.zeros((B, H), jnp.float32))
    _, hs = lax.scan(cell, init, x_tm)                           # (T, B, H)
    h_n = hs[audio_lengths.astype(jnp.int32) - 1, jnp.arange(B)]  # h at last valid step
    y = h_n @ w1.T + b1
    return y @ w2.T + b2


if __name__ == "__main__":
    key = jax.random.PRNGKey(0)
    k_audio, k_params = jax.random.split(key)

    # Small shapes consistent with the module: batch=2, seq=8, audio_in=16.
    B, T, D_AUDIO = 2, 8, 16
    audio = jax.random.normal(k_audio, (B, T, D_AUDIO), jnp.float32)
    audio_lengths = jnp.array([T, 5], dtype=jnp.int32)   # ragged, as pack_padded_sequence expects

    # text_x / video_x are unused in TEST1.forward; only audio_x is consumed.
    torch_params = init_torch_like_params(k_params, D_AUDIO)
    kernel_params = prepare_kernel_params(torch_params)

    fwd = jax.jit(test1_forward)
    res = fwd(audio, audio_lengths, kernel_params)
    out = jax.block_until_ready(res["M"])
    assert out.shape == (B, OUT2)

    # Tolerance loosened (2e-2) because the critical-path matmuls run in bf16 with f32
    # accumulation; gate/state math and the tail stay in f32.
    ref = test1_reference(audio, audio_lengths, torch_params)
    assert jnp.allclose(out, ref, atol=2e-2, rtol=2e-2), (out, ref)
    print("KERNEL_OK")
</pallas_src>

<mosaic_0001>
module attributes {stable_mosaic.version = 11 : i64} {
  func.func @_lstm_head_kernel(%arg0: memref<8x1xi32, #tpu.memory_space<vmem>>, %arg1: memref<64x16xbf16, #tpu.memory_space<vmem>>, %arg2: memref<16x512xbf16, #tpu.memory_space<vmem>>, %arg3: memref<128x512xbf16, #tpu.memory_space<vmem>>, %arg4: memref<1x512xf32, #tpu.memory_space<vmem>>, %arg5: memref<128x128xf32, #tpu.memory_space<vmem>>, %arg6: memref<1x128xf32, #tpu.memory_space<vmem>>, %arg7: memref<8x128xf32, #tpu.memory_space<vmem>>, %arg8: memref<64x512xf32, #tpu.memory_space<vmem>>) attributes {dimension_semantics = [], scalar_prefetch = 0 : i64, scratch_operands = 1 : i64, tpu.core_type = #tpu.core_type<tc>} {
    %c0 = arith.constant 0 : index
    %c0_0 = arith.constant 0 : index
    %0 = vector.load %arg1[%c0, %c0_0] : memref<64x16xbf16, #tpu.memory_space<vmem>>, vector<64x16xbf16>
    %c0_1 = arith.constant 0 : index
    %c0_2 = arith.constant 0 : index
    %1 = vector.load %arg2[%c0_1, %c0_2] : memref<16x512xbf16, #tpu.memory_space<vmem>>, vector<16x512xbf16>
    %cst = arith.constant dense<0.000000e+00> : vector<64x512xf32>
    %2 = tpu.matmul %0, %1, %cst {dimension_numbers = #tpu.dot_dimension_numbers<[1], [0], [0], [1], [0, 0, 1, 1], [], []>} : vector<64x16xbf16>, vector<16x512xbf16>, vector<64x512xf32> -> vector<64x512xf32>
    %c0_3 = arith.constant 0 : index
    %c0_4 = arith.constant 0 : index
    %3 = vector.load %arg4[%c0_3, %c0_4] : memref<1x512xf32, #tpu.memory_space<vmem>>, vector<1x512xf32>
    %4 = vector.broadcast %3 : vector<1x512xf32> to vector<64x512xf32>
    %5 = arith.addf %2, %4 : vector<64x512xf32>
    %c0_5 = arith.constant 0 : index
    %c0_6 = arith.constant 0 : index
    %6 = vector.load %arg8[%c0_5, %c0_6] : memref<64x512xf32, #tpu.memory_space<vmem>>, vector<64x512xf32>
    tpu.vector_store %arg8[%c0_5, %c0_6], %5 {strides = array<i32>} : memref<64x512xf32, #tpu.memory_space<vmem>>, vector<64x512xf32>,
    %c0_7 = arith.constant 0 : index
    %c0_8 = arith.constant 0 : index
    %7 = vector.load %arg3[%c0_7, %c0_8] : memref<128x512xbf16, #tpu.memory_space<vmem>>, vector<128x512xbf16>
    %c0_9 = arith.constant 0 : index
    %c0_10 = arith.constant 0 : index
    %8 = vector.load %arg0[%c0_9, %c0_10] : memref<8x1xi32, #tpu.memory_space<vmem>>, vector<8x1xi32>
    %9 = tpu.iota {dimensions = array<i32: 1>} : vector<8x8xi32>
    %10 = vector.broadcast %8 : vector<8x1xi32> to vector<8x8xi32>
    %11 = arith.cmpi slt, %9, %10 : vector<8x8xi32>
    %cst_11 = arith.constant 0.000000e+00 : f32
    %12 = vector.broadcast %cst_11 : f32 to vector<8x128xf32>
    %cst_12 = arith.constant 0.000000e+00 : f32
    %13 = vector.broadcast %cst_12 : f32 to vector<8x128xf32>
    %c0_13 = arith.constant 0 : index
    %c0_14 = arith.constant 0 : index
    %14 = vector.load %arg8[%c0_13, %c0_14] : memref<64x512xf32, #tpu.memory_space<vmem>>, vector<8x512xf32>
    %15 = arith.truncf %12 : vector<8x128xf32> to vector<8x128xbf16>
    %cst_15 = arith.constant dense<0.000000e+00> : vector<8x512xf32>
    %16 = tpu.matmul %15, %7, %cst_15 {dimension_numbers = #tpu.dot_dimension_numbers<[1], [0], [0], [1], [0, 0, 1, 1], [], []>} : vector<8x128xbf16>, vector<128x512xbf16>, vector<8x512xf32> -> vector<8x512xf32>
    %17 = arith.addf %14, %16 : vector<8x512xf32>
    %18 = vector.extract_strided_slice %17 {offsets = [0, 0], sizes = [8, 384], strides = [1, 1]} : vector<8x512xf32> to vector<8x384xf32>
    %19 = arith.negf %18 : vector<8x384xf32>
    %20 = math.exp %19 : vector<8x384xf32>
    %cst_16 = arith.constant 1.000000e+00 : f32
    %21 = vector.broadcast %cst_16 : f32 to vector<8x384xf32>
    %22 = arith.addf %21, %20 : vector<8x384xf32>
    %23 = arith.divf %21, %22 : vector<8x384xf32>
    %24 = vector.extract_strided_slice %23 {offsets = [0, 0], sizes = [8, 128], strides = [1, 1]} : vector<8x384xf32> to vector<8x128xf32>
    %25 = vector.extract_strided_slice %23 {offsets = [0, 128], sizes = [8, 128], strides = [1, 1]} : vector<8x384xf32> to vector<8x128xf32>
    %26 = vector.extract_strided_slice %23 {offsets = [0, 256], sizes = [8, 128], strides = [1, 1]} : vector<8x384xf32> to vector<8x128xf32>
    %27 = vector.extract_strided_slice %17 {offsets = [0, 384], sizes = [8, 128], strides = [1, 1]} : vector<8x512xf32> to vector<8x128xf32>
    %28 = math.tanh %27 : vector<8x128xf32>
    %29 = arith.mulf %25, %13 : vector<8x128xf32>
    %30 = arith.mulf %24, %28 : vector<8x128xf32>
    %31 = arith.addf %29, %30 : vector<8x128xf32>
    %32 = math.tanh %31 : vector<8x128xf32>
    %33 = arith.mulf %26, %32 : vector<8x128xf32>
    %34 = vector.extract_strided_slice %11 {offsets = [0, 0], sizes = [8, 1], strides = [1, 1]} : vector<8x8xi1> to vector<8x1xi1>
    %35 = vector.shape_cast %34 : vector<8x1xi1> to vector<8x1xi1>
    %36 = vector.broadcast %35 : vector<8x1xi1> to vector<8x128xi1>
    %37 = arith.select %36, %31, %13 : vector<8x128xi1>, vector<8x128xf32>
    %38 = vector.shape_cast %34 : vector<8x1xi1> to vector<8x1xi1>
    %39 = vector.broadcast %38 : vector<8x1xi1> to vector<8x128xi1>
    %40 = arith.select %39, %33, %12 : vector<8x128xi1>, vector<8x128xf32>
    %c8 = arith.constant 8 : index
    %c0_17 = arith.constant 0 : index
    %41 = vector.load %arg8[%c8, %c0_17] : memref<64x512xf32, #tpu.memory_space<vmem>>, vector<8x512xf32>
    %42 = arith.truncf %40 : vector<8x128xf32> to vector<8x128xbf16>
    %cst_18 = arith.constant dense<0.000000e+00> : vector<8x512xf32>
    %43 = tpu.matmul %42, %7, %cst_18 {dimension_numbers = #tpu.dot_dimension_numbers<[1], [0], [0], [1], [0, 0, 1, 1], [], []>} : vector<8x128xbf16>, vector<128x512xbf16>, vector<8x512xf32> -> vector<8x512xf32>
    %44 = arith.addf %41, %43 : vector<8x512xf32>
    %45 = vector.extract_strided_slice %44 {offsets = [0, 0], sizes = [8, 384], strides = [1, 1]} : vector<8x512xf32> to vector<8x384xf32>
    %46 = arith.negf %45 : vector<8x384xf32>
    %47 = math.exp %46 : vector<8x384xf32>
    %cst_19 = arith.constant 1.000000e+00 : f32
    %48 = vector.broadcast %cst_19 : f32 to vector<8x384xf32>
    %49 = arith.addf %48, %47 : vector<8x384xf32>
    %50 = arith.divf %48, %49 : vector<8x384xf32>
    %51 = vector.extract_strided_slice %50 {offsets = [0, 0], sizes = [8, 128], strides = [1, 1]} : vector<8x384xf32> to vector<8x128xf32>
    %52 = vector.extract_strided_slice %50 {offsets = [0, 128], sizes = [8, 128], strides = [1, 1]} : vector<8x384xf32> to vector<8x128xf32>
    %53 = vector.extract_strided_slice %50 {offsets = [0, 256], sizes = [8, 128], strides = [1, 1]} : vector<8x384xf32> to vector<8x128xf32>
    %54 = vector.extract_strided_slice %44 {offsets = [0, 384], sizes = [8, 128], strides = [1, 1]} : vector<8x512xf32> to vector<8x128xf32>
    %55 = math.tanh %54 : vector<8x128xf32>
    %56 = arith.mulf %52, %37 : vector<8x128xf32>
    %57 = arith.mulf %51, %55 : vector<8x128xf32>
    %58 = arith.addf %56, %57 : vector<8x128xf32>
    %59 = math.tanh %58 : vector<8x128xf32>
    %60 = arith.mulf %53, %59 : vector<8x128xf32>
    %61 = vector.extract_strided_slice %11 {offsets = [0, 1], sizes = [8, 1], strides = [1, 1]} : vector<8x8xi1> to vector<8x1xi1>
    %62 = vector.shape_cast %61 : vector<8x1xi1> to vector<8x1xi1>
    %63 = vector.broadcast %62 : vector<8x1xi1> to vector<8x128xi1>
    %64 = arith.select %63, %58, %37 : vector<8x128xi1>, vector<8x128xf32>
    %65 = vector.shape_cast %61 : vector<8x1xi1> to vector<8x1xi1>
    %66 = vector.broadcast %65 : vector<8x1xi1> to vector<8x128xi1>
    %67 = arith.select %66, %60, %40 : vector<8x128xi1>, vector<8x128xf32>
    %c16 = arith.constant 16 : index
    %c0_20 = arith.constant 0 : index
    %68 = vector.load %arg8[%c16, %c0_20] : memref<64x512xf32, #tpu.memory_space<vmem>>, vector<8x512xf32>
    %69 = arith.truncf %67 : vector<8x128xf32> to vector<8x128xbf16>
    %cst_21 = arith.constant dense<0.000000e+00> : vector<8x512xf32>
    %70 = tpu.matmul %69, %7, %cst_21 {dimension_numbers = #tpu.dot_dimension_numbers<[1], [0], [0], [1], [0, 0, 1, 1], [], []>} : vector<8x128xbf16>, vector<128x512xbf16>, vector<8x512xf32> -> vector<8x512xf32>
    %71 = arith.addf %68, %70 : vector<8x512xf32>
    %72 = vector.extract_strided_slice %71 {offsets = [0, 0], sizes = [8, 384], strides = [1, 1]} : vector<8x512xf32> to vector<8x384xf32>
    %73 = arith.negf %72 : vector<8x384xf32>
    %74 = math.exp %73 : vector<8x384xf32>
    %cst_22 = arith.constant 1.000000e+00 : f32
    %75 = vector.broadcast %cst_22 : f32 to vector<8x384xf32>
    %76 = arith.addf %75, %74 : vector<8x384xf32>
    %77 = arith.divf %75, %76 : vector<8x384xf32>
    %78 = vector.extract_strided_slice %77 {offsets = [0, 0], sizes = [8, 128], strides = [1, 1]} : vector<8x384xf32> to vector<8x128xf32>
    %79 = vector.extract_strided_slice %77 {offsets = [0, 128], sizes = [8, 128], strides = [1, 1]} : vector<8x384xf32> to vector<8x128xf32>
    %80 = vector.extract_strided_slice %77 {offsets = [0, 256], sizes = [8, 128], strides = [1, 1]} : vector<8x384xf32> to vector<8x128xf32>
    %81 = vector.extract_strided_slice %71 {offsets = [0, 384], sizes = [8, 128], strides = [1, 1]} : vector<8x512xf32> to vector<8x128xf32>
    %82 = math.tanh %81 : vector<8x128xf32>
    %83 = arith.mulf %79, %64 : vector<8x128xf32>
    %84 = arith.mulf %78, %82 : vector<8x128xf32>
    %85 = arith.addf %83, %84 : vector<8x128xf32>
    %86 = math.tanh %85 : vector<8x128xf32>
    %87 = arith.mulf %80, %86 : vector<8x128xf32>
    %88 = vector.extract_strided_slice %11 {offsets = [0, 2], sizes = [8, 1], strides = [1, 1]} : vector<8x8xi1> to vector<8x1xi1>
    %89 = vector.shape_cast %88 : vector<8x1xi1> to vector<8x1xi1>
    %90 = vector.broadcast %89 : vector<8x1xi1> to vector<8x128xi1>
    %91 = arith.select %90, %85, %64 : vector<8x128xi1>, vector<8x128xf32>
    %92 = vector.shape_cast %88 : vector<8x1xi1> to vector<8x1xi1>
    %93 = vector.broadcast %92 : vector<8x1xi1> to vector<8x128xi1>
    %94 = arith.select %93, %87, %67 : vector<8x128xi1>, vector<8x128xf32>
    %c24 = arith.constant 24 : index
    %c0_23 = arith.constant 0 : index
    %95 = vector.load %arg8[%c24, %c0_23] : memref<64x512xf32, #tpu.memory_space<vmem>>, vector<8x512xf32>
    %96 = arith.truncf %94 : vector<8x128xf32> to vector<8x128xbf16>
    %cst_24 = arith.constant dense<0.000000e+00> : vector<8x512xf32>
    %97 = tpu.matmul %96, %7, %cst_24 {dimension_numbers = #tpu.dot_dimension_numbers<[1], [0], [0], [1], [0, 0, 1, 1], [], []>} : vector<8x128xbf16>, vector<128x512xbf16>, vector<8x512xf32> -> vector<8x512xf32>
    %98 = arith.addf %95, %97 : vector<8x512xf32>
    %99 = vector.extract_strided_slice %98 {offsets = [0, 0], sizes = [8, 384], strides = [1, 1]} : vector<8x512xf32> to vector<8x384xf32>
    %100 = arith.negf %99 : vector<8x384xf32>
    %101 = math.exp %100 : vector<8x384xf32>
    %cst_25 = arith.constant 1.000000e+00 : f32
    %102 = vector.broadcast %cst_25 : f32 to vector<8x384xf32>
    %103 = arith.addf %102, %101 : vector<8x384xf32>
    %104 = arith.divf %102, %103 : vector<8x384xf32>
    %105 = vector.extract_strided_slice %104 {offsets = [0, 0], sizes = [8, 128], strides = [1, 1]} : vector<8x384xf32> to vector<8x128xf32>
    %106 = vector.extract_strided_slice %104 {offsets = [0, 128], sizes = [8, 128], strides = [1, 1]} : vector<8x384xf32> to vector<8x128xf32>
    %107 = vector.extract_strided_slice %104 {offsets = [0, 256], sizes = [8, 128], strides = [1, 1]} : vector<8x384xf32> to vector<8x128xf32>
    %108 = vector.extract_strided_slice %98 {offsets = [0, 384], sizes = [8, 128], strides = [1, 1]} : vector<8x512xf32> to vector<8x128xf32>
    %109 = math.tanh %108 : vector<8x128xf32>
    %110 = arith.mulf %106, %91 : vector<8x128xf32>
    %111 = arith.mulf %105, %109 : vector<8x128xf32>
    %112 = arith.addf %110, %111 : vector<8x128xf32>
    %113 = math.tanh %112 : vector<8x128xf32>
    %114 = arith.mulf %107, %113 : vector<8x128xf32>
    %115 = vector.extract_strided_slice %11 {offsets = [0, 3], sizes = [8, 1], strides = [1, 1]} : vector<8x8xi1> to vector<8x1xi1>
    %116 = vector.shape_cast %115 : vector<8x1xi1> to vector<8x1xi1>
    %117 = vector.broadcast %116 : vector<8x1xi1> to vector<8x128xi1>
    %118 = arith.select %117, %112, %91 : vector<8x128xi1>, vector<8x128xf32>
    %119 = vector.shape_cast %115 : vector<8x1xi1> to vector<8x1xi1>
    %120 = vector.broadcast %119 : vector<8x1xi1> to vector<8x128xi1>
    %121 = arith.select %120, %114, %94 : vector<8x128xi1>, vector<8x128xf32>
    %c32 = arith.constant 32 : index
    %c0_26 = arith.constant 0 : index
    %122 = vector.load %arg8[%c32, %c0_26] : memref<64x512xf32, #tpu.memory_space<vmem>>, vector<8x512xf32>
    %123 = arith.truncf %121 : vector<8x128xf32> to vector<8x128xbf16>
    %cst_27 = arith.constant dense<0.000000e+00> : vector<8x512xf32>
    %124 = tpu.matmul %123, %7, %cst_27 {dimension_numbers = #tpu.dot_dimension_numbers<[1], [0], [0], [1], [0, 0, 1, 1], [], []>} : vector<8x128xbf16>, vector<128x512xbf16>, vector<8x512xf32> -> vector<8x512xf32>
    %125 = arith.addf %122, %124 : vector<8x512xf32>
    %126 = vector.extract_strided_slice %125 {offsets = [0, 0], sizes = [8, 384], strides = [1, 1]} : vector<8x512xf32> to vector<8x384xf32>
    %127 = arith.negf %126 : vector<8x384xf32>
    %128 = math.exp %127 : vector<8x384xf32>
    %cst_28 = arith.constant 1.000000e+00 : f32
    %129 = vector.broadcast %cst_28 : f32 to vector<8x384xf32>
    %130 = arith.addf %129, %128 : vector<8x384xf32>
    %131 = arith.divf %129, %130 : vector<8x384xf32>
    %132 = vector.extract_strided_slice %131 {offsets = [0, 0], sizes = [8, 128], strides = [1, 1]} : vector<8x384xf32> to vector<8x128xf32>
    %133 = vector.extract_strided_slice %131 {offsets = [0, 128], sizes = [8, 128], strides = [1, 1]} : vector<8x384xf32> to vector<8x128xf32>
    %134 = vector.extract_strided_slice %131 {offsets = [0, 256], sizes = [8, 128], strides = [1, 1]} : vector<8x384xf32> to vector<8x128xf32>
    %135 = vector.extract_strided_slice %125 {offsets = [0, 384], sizes = [8, 128], strides = [1, 1]} : vector<8x512xf32> to vector<8x128xf32>
    %136 = math.tanh %135 : vector<8x128xf32>
    %137 = arith.mulf %133, %118 : vector<8x128xf32>
    %138 = arith.mulf %132, %136 : vector<8x128xf32>
    %139 = arith.addf %137, %138 : vector<8x128xf32>
    %140 = math.tanh %139 : vector<8x128xf32>
    %141 = arith.mulf %134, %140 : vector<8x128xf32>
    %142 = vector.extract_strided_slice %11 {offsets = [0, 4], sizes = [8, 1], strides = [1, 1]} : vector<8x8xi1> to vector<8x1xi1>
    %143 = vector.shape_cast %142 : vector<8x1xi1> to vector<8x1xi1>
    %144 = vector.broadcast %143 : vector<8x1xi1> to vector<8x128xi1>
    %145 = arith.select %144, %139, %118 : vector<8x128xi1>, vector<8x128xf32>
    %146 = vector.shape_cast %142 : vector<8x1xi1> to vector<8x1xi1>
    %147 = vector.broadcast %146 : vector<8x1xi1> to vector<8x128xi1>
    %148 = arith.select %147, %141, %121 : vector<8x128xi1>, vector<8x128xf32>
    %c40 = arith.constant 40 : index
    %c0_29 = arith.constant 0 : index
    %149 = vector.load %arg8[%c40, %c0_29] : memref<64x512xf32, #tpu.memory_space<vmem>>, vector<8x512xf32>
    %150 = arith.truncf %148 : vector<8x128xf32> to vector<8x128xbf16>
    %cst_30 = arith.constant dense<0.000000e+00> : vector<8x512xf32>
    %151 = tpu.matmul %150, %7, %cst_30 {dimension_numbers = #tpu.dot_dimension_numbers<[1], [0], [0], [1], [0, 0, 1, 1], [], []>} : vector<8x128xbf16>, vector<128x512xbf16>, vector<8x512xf32> -> vector<8x512xf32>
    %152 = arith.addf %149, %151 : vector<8x512xf32>
    %153 = vector.extract_strided_slice %152 {offsets = [0, 0], sizes = [8, 384], strides = [1, 1]} : vector<8x512xf32> to vector<8x384xf32>
    %154 = arith.negf %153 : vector<8x384xf32>
    %155 = math.exp %154 : vector<8x384xf32>
    %cst_31 = arith.constant 1.000000e+00 : f32
    %156 = vector.broadcast %cst_31 : f32 to vector<8x384xf32>
    %157 = arith.addf %156, %155 : vector<8x384xf32>
    %158 = arith.divf %156, %157 : vector<8x384xf32>
    %159 = vector.extract_strided_slice %158 {offsets = [0, 0], sizes = [8, 128], strides = [1, 1]} : vector<8x384xf32> to vector<8x128xf32>
    %160 = vector.extract_strided_slice %158 {offsets = [0, 128], sizes = [8, 128], strides = [1, 1]} : vector<8x384xf32> to vector<8x128xf32>
    %161 = vector.extract_strided_slice %158 {offsets = [0, 256], sizes = [8, 128], strides = [1, 1]} : vector<8x384xf32> to vector<8x128xf32>
    %162 = vector.extract_strided_slice %152 {offsets = [0, 384], sizes = [8, 128], strides = [1, 1]} : vector<8x512xf32> to vector<8x128xf32>
    %163 = math.tanh %162 : vector<8x128xf32>
    %164 = arith.mulf %160, %145 : vector<8x128xf32>
    %165 = arith.mulf %159, %163 : vector<8x128xf32>
    %166 = arith.addf %164, %165 : vector<8x128xf32>
    %167 = math.tanh %166 : vector<8x128xf32>
    %168 = arith.mulf %161, %167 : vector<8x128xf32>
    %169 = vector.extract_strided_slice %11 {offsets = [0, 5], sizes = [8, 1], strides = [1, 1]} : vector<8x8xi1> to vector<8x1xi1>
    %170 = vector.shape_cast %169 : vector<8x1xi1> to vector<8x1xi1>
    %171 = vector.broadcast %170 : vector<8x1xi1> to vector<8x128xi1>
    %172 = arith.select %171, %166, %145 : vector<8x128xi1>, vector<8x128xf32>
    %173 = vector.shape_cast %169 : vector<8x1xi1> to vector<8x1xi1>
    %174 = vector.broadcast %173 : vector<8x1xi1> to vector<8x128xi1>
    %175 = arith.select %174, %168, %148 : vector<8x128xi1>, vector<8x128xf32>
    %c48 = arith.constant 48 : index
    %c0_32 = arith.constant 0 : index
    %176 = vector.load %arg8[%c48, %c0_32] : memref<64x512xf32, #tpu.memory_space<vmem>>, vector<8x512xf32>
    %177 = arith.truncf %175 : vector<8x128xf32> to vector<8x128xbf16>
    %cst_33 = arith.constant dense<0.000000e+00> : vector<8x512xf32>
    %178 = tpu.matmul %177, %7, %cst_33 {dimension_numbers = #tpu.dot_dimension_numbers<[1], [0], [0], [1], [0, 0, 1, 1], [], []>} : vector<8x128xbf16>, vector<128x512xbf16>, vector<8x512xf32> -> vector<8x512xf32>
    %179 = arith.addf %176, %178 : vector<8x512xf32>
    %180 = vector.extract_strided_slice %179 {offsets = [0, 0], sizes = [8, 384], strides = [1, 1]} : vector<8x512xf32> to vector<8x384xf32>
    %181 = arith.negf %180 : vector<8x384xf32>
    %182 = math.exp %181 : vector<8x384xf32>
    %cst_34 = arith.constant 1.000000e+00 : f32
    %183 = vector.broadcast %cst_34 : f32 to vector<8x384xf32>
    %184 = arith.addf %183, %182 : vector<8x384xf32>
    %185 = arith.divf %183, %184 : vector<8x384xf32>
    %186 = vector.extract_strided_slice %185 {offsets = [0, 0], sizes = [8, 128], strides = [1, 1]} : vector<8x384xf32> to vector<8x128xf32>
    %187 = vector.extract_strided_slice %185 {offsets = [0, 128], sizes = [8, 128], strides = [1, 1]} : vector<8x384xf32> to vector<8x128xf32>
    %188 = vector.extract_strided_slice %185 {offsets = [0, 256], sizes = [8, 128], strides = [1, 1]} : vector<8x384xf32> to vector<8x128xf32>
    %189 = vector.extract_strided_slice %179 {offsets = [0, 384], sizes = [8, 128], strides = [1, 1]} : vector<8x512xf32> to vector<8x128xf32>
    %190 = math.tanh %189 : vector<8x128xf32>
    %191 = arith.mulf %187, %172 : vector<8x128xf32>
    %192 = arith.mulf %186, %190 : vector<8x128xf32>
    %193 = arith.addf %191, %192 : vector<8x128xf32>
    %194 = math.tanh %193 : vector<8x128xf32>
    %195 = arith.mulf %188, %194 : vector<8x128xf32>
    %196 = vector.extract_strided_slice %11 {offsets = [0, 6], sizes = [8, 1], strides = [1, 1]} : vector<8x8xi1> to vector<8x1xi1>
    %197 = vector.shape_cast %196 : vector<8x1xi1> to vector<8x1xi1>
    %198 = vector.broadcast %197 : vector<8x1xi1> to vector<8x128xi1>
    %199 = arith.select %198, %193, %172 : vector<8x128xi1>, vector<8x128xf32>
    %200 = vector.shape_cast %196 : vector<8x1xi1> to vector<8x1xi1>
    %201 = vector.broadcast %200 : vector<8x1xi1> to vector<8x128xi1>
    %202 = arith.select %201, %195, %175 : vector<8x128xi1>, vector<8x128xf32>
    %c56 = arith.constant 56 : index
    %c0_35 = arith.constant 0 : index
    %203 = vector.load %arg8[%c56, %c0_35] : memref<64x512xf32, #tpu.memory_space<vmem>>, vector<8x512xf32>
    %204 = arith.truncf %202 : vector<8x128xf32> to vector<8x128xbf16>
    %cst_36 = arith.constant dense<0.000000e+00> : vector<8x512xf32>
    %205 = tpu.matmul %204, %7, %cst_36 {dimension_numbers = #tpu.dot_dimension_numbers<[1], [0], [0], [1], [0, 0, 1, 1], [], []>} : vector<8x128xbf16>, vector<128x512xbf16>, vector<8x512xf32> -> vector<8x512xf32>
    %206 = arith.addf %203, %205 : vector<8x512xf32>
    %207 = vector.extract_strided_slice %206 {offsets = [0, 0], sizes = [8, 384], strides = [1, 1]} : vector<8x512xf32> to vector<8x384xf32>
    %208 = arith.negf %207 : vector<8x384xf32>
    %209 = math.exp %208 : vector<8x384xf32>
    %cst_37 = arith.constant 1.000000e+00 : f32
    %210 = vector.broadcast %cst_37 : f32 to vector<8x384xf32>
    %211 = arith.addf %210, %209 : vector<8x384xf32>
    %212 = arith.divf %210, %211 : vector<8x384xf32>
    %213 = vector.extract_strided_slice %212 {offsets = [0, 0], sizes = [8, 128], strides = [1, 1]} : vector<8x384xf32> to vector<8x128xf32>
    %214 = vector.extract_strided_slice %212 {offsets = [0, 128], sizes = [8, 128], strides = [1, 1]} : vector<8x384xf32> to vector<8x128xf32>
    %215 = vector.extract_strided_slice %212 {offsets = [0, 256], sizes = [8, 128], strides = [1, 1]} : vector<8x384xf32> to vector<8x128xf32>
    %216 = vector.extract_strided_slice %206 {offsets = [0, 384], sizes = [8, 128], strides = [1, 1]} : vector<8x512xf32> to vector<8x128xf32>
    %217 = math.tanh %216 : vector<8x128xf32>
    %218 = arith.mulf %214, %199 : vector<8x128xf32>
    %219 = arith.mulf %213, %217 : vector<8x128xf32>
    %220 = arith.addf %218, %219 : vector<8x128xf32>
    %221 = math.tanh %220 : vector<8x128xf32>
    %222 = arith.mulf %215, %221 : vector<8x128xf32>
    %223 = vector.extract_strided_slice %11 {offsets = [0, 7], sizes = [8, 1], strides = [1, 1]} : vector<8x8xi1> to vector<8x1xi1>
    %224 = vector.shape_cast %223 : vector<8x1xi1> to vector<8x1xi1>
    %225 = vector.broadcast %224 : vector<8x1xi1> to vector<8x128xi1>
    %226 = arith.select %225, %222, %202 : vector<8x128xi1>, vector<8x128xf32>
    %c0_38 = arith.constant 0 : index
    %c0_39 = arith.constant 0 : index
    %227 = vector.load %arg5[%c0_38, %c0_39] : memref<128x128xf32, #tpu.memory_space<vmem>>, vector<128x128xf32>
    %cst_40 = arith.constant dense<0.000000e+00> : vector<8x128xf32>
    %228 = tpu.matmul %226, %227, %cst_40 {dimension_numbers = #tpu.dot_dimension_numbers<[1], [0], [0], [1], [0, 0, 1, 1], [], []>} : vector<8x128xf32>, vector<128x128xf32>, vector<8x128xf32> -> vector<8x128xf32>
    %c0_41 = arith.constant 0 : index
    %c0_42 = arith.constant 0 : index
    %229 = vector.load %arg6[%c0_41, %c0_42] : memref<1x128xf32, #tpu.memory_space<vmem>>, vector<1x128xf32>
    %230 = vector.broadcast %229 : vector<1x128xf32> to vector<8x128xf32>
    %231 = arith.addf %228, %230 : vector<8x128xf32>
    %c0_43 = arith.constant 0 : index
    %c0_44 = arith.constant 0 : index
    %232 = vector.load %arg7[%c0_43, %c0_44] : memref<8x128xf32, #tpu.memory_space<vmem>>, vector<8x128xf32>
    tpu.vector_store %arg7[%c0_43, %c0_44], %231 {strides = array<i32>} : memref<8x128xf32, #tpu.memory_space<vmem>>, vector<8x128xf32>,
    return
  }
}

</mosaic_0001>

<llo_original>
// kernel: test1_forward.1
$region0: #{test1_forward.1}
  #allocation0 [shape = 'u32[]', space=smem, size = 0x4, offset = 0x4, fixed_abs, tag = 'smem constant byte address 0x4 - core index']
  #allocation1 [shape = 'u32[72,128]{1,0:T(1,128)}', space=vmem, size = 0x9000, scoped, tag = 'internal scratch']
  #allocation2 [shape = 'f32[64,512]{1,0:T(8,128)}', space=vmem, size = 0x20000, scoped, tag = 'scratch operand']
  %s0 = inlined_call_operand.vmem [shape: s32[8,1], index: 0, kind: input, shape index: {}]
  %s1 = inlined_call_operand.vmem [shape: bf16[64,16], index: 1, kind: input, shape index: {}]
  %s2 = inlined_call_operand.hbm [shape: bf16[16,512], index: 2, kind: input, shape index: {}]
  %s3 = inlined_call_operand.hbm [shape: bf16[128,512], index: 3, kind: input, shape index: {}]
  %s4 = inlined_call_operand.vmem [shape: f32[1,512], index: 4, kind: input, shape index: {}]
  %s5 = inlined_call_operand.vmem [shape: f32[128,128], index: 5, kind: input, shape index: {}]
  %s6 = inlined_call_operand.vmem [shape: f32[1,128], index: 6, kind: input, shape index: {}]
  %s7 = inlined_call_operand.vmem [shape: f32[8,128], index: 7, kind: output, shape index: {}]
  %s8 = sld [smem:[#allocation0]]
  $region46: #{test1_forward.1} parent=0
    _
  %s10 = ssub.s32 1, %s8
  %s11 = scalar_select 0, %s10, %s8
  $region1: #{test1_forward.1} parent=0
    #allocation3 [shape = 'u8[16384]{0}', space=vmem, size = 0x4000, scoped, tag = 'input window, operand 2, single buffered']
    #allocation4 [shape = 's32[1]{0}', space=sflag, size = 0x4, scoped, tag = 'scoped memory for test1_forward.1']
    #allocation5 [shape = 'u8[131072]{0}', space=vmem, size = 0x20000, scoped, tag = 'input window, operand 3, single buffered']
    #allocation6 [shape = 's32[1]{0}', space=sflag, size = 0x4, scoped, tag = 'scoped memory for test1_forward.1']
    %12 = vsyncpa [#allocation4], 0
    %13 = vsyncpa [#allocation6], 0
    // Predicated region
    $region2: #{test1_forward.1} parent=1 // pred_check
      _
    $region3: #{test1_forward.1} parent=1 // pred_check_branch
      %15 = sbr.rel (0) target = $region5
    $region4: #{test1_forward.1} parent=1 // pred_region
      _
    $region5: #{test1_forward.1} parent=1 // pred_fallthru
      _
    // Predicated region
    $region6: #{test1_forward.1} parent=1 // pred_check
      _
    $region7: #{test1_forward.1} parent=1 // pred_check_branch
      %17 = sbr.rel (0) target = $region9
    $region8: #{test1_forward.1} parent=1 // pred_region
      _
    $region9: #{test1_forward.1} parent=1 // pred_fallthru
      _
    // Predicated region
    $region10: #{test1_forward.1} parent=1 // pred_check
      _
    $region11: #{test1_forward.1} parent=1 // pred_check_branch
      %19 = sbr.rel (0) target = $region13
    $region12: #{test1_forward.1} parent=1 // pred_region
      %21 = vsyncadd [#allocation4], 0
      %s22 = sshll.u32 %s2, 4
      %s23 = int_to_ptr.hbm [resolvable:$true] %s22
      %s24 = sshll.u32 [#allocation3], 4
      %s25 = int_to_ptr.vmem [resolvable:$true] %s24
      %30 = dma.hbm_to_vmem [thread:$0]  %s23, 512, %s25, [#allocation4], 256, 256, 16
    $region13: #{test1_forward.1} parent=1 // pred_fallthru
      _
    // Predicated region
    $region14: #{test1_forward.1} parent=1 // pred_check
      _
    $region15: #{test1_forward.1} parent=1 // pred_check_branch
      %32 = sbr.rel (0) target = $region17
    $region16: #{test1_forward.1} parent=1 // pred_region
      %34 = vsyncadd [#allocation6], 0
      %s35 = sshll.u32 %s3, 4
      %s36 = int_to_ptr.hbm [resolvable:$true] %s35
      %s37 = sshll.u32 [#allocation5], 4
      %s38 = int_to_ptr.vmem [resolvable:$true] %s37
      %43 = dma.hbm_to_vmem [thread:$0]  %s36, 4096, %s38, [#allocation6], 256, 256, 16
    $region17: #{test1_forward.1} parent=1 // pred_fallthru
      _
    // Predicated region
    $region18: #{test1_forward.1} parent=1 // pred_check
      _
    $region19: #{test1_forward.1} parent=1 // pred_check_branch
      %45 = sbr.rel (0) target = $region21
    $region20: #{test1_forward.1} parent=1 // pred_region
      _
    $region21: #{test1_forward.1} parent=1 // pred_fallthru
      _
    // Predicated region
    $region22: #{test1_forward.1} parent=1 // pred_check
      _
    $region23: #{test1_forward.1} parent=1 // pred_check_branch
      %47 = sbr.rel (0) target = $region25
    $region24: #{test1_forward.1} parent=1 // pred_region
      _
    $region25: #{test1_forward.1} parent=1 // pred_fallthru
      _
    // Predicated region
    $region26: #{test1_forward.1} parent=1 // pred_check
      _
    $region27: #{test1_forward.1} parent=1 // pred_check_branch
      %49 = sbr.rel (0) target = $region29
    $region28: #{test1_forward.1} parent=1 // pred_region
      _
    $region29: #{test1_forward.1} parent=1 // pred_fallthru
      _
    // Predicated region
    $region30: #{test1_forward.1} parent=1 // pred_check
      _
    $region31: #{test1_forward.1} parent=1 // pred_check_branch
      %51 = sbr.rel (0) target = $region33
    $region32: #{test1_forward.1} parent=1 // pred_region
      %53 = dma.done [#allocation4], 512
    $region33: #{test1_forward.1} parent=1 // pred_fallthru
      _
    // Predicated region
    $region34: #{test1_forward.1} parent=1 // pred_check
      _
    $region35: #{test1_forward.1} parent=1 // pred_check_branch
      %55 = sbr.rel (0) target = $region37
    $region36: #{test1_forward.1} parent=1 // pred_region
      %57 = dma.done [#allocation6], 4096
    $region37: #{test1_forward.1} parent=1 // pred_fallthru
      _
    %v59 = vld [vmem:[%s1] sm:$0xf]
    %v60 = vld [vmem:[%s1 + $0x4] sm:$0xf]
    %v61 = vld [vmem:[%s1 + $0x8] sm:$0xf]
    %v62 = vld [vmem:[%s1 + $0xc] sm:$0xf]
    %v63 = vld [vmem:[%s1 + $0x10] sm:$0xf]
    %v64 = vld [vmem:[%s1 + $0x14] sm:$0xf]
    %v65 = vld [vmem:[%s1 + $0x18] sm:$0xf]
    %v66 = vld [vmem:[%s1 + $0x1c] sm:$0xf]
    %v67 = vld [vmem:[#allocation3] sm:$0xff]
    %v68 = vld [vmem:[#allocation3 + $0x8] sm:$0xff]
    %v69 = vld [vmem:[#allocation3 + $0x10] sm:$0xff]
    %v70 = vld [vmem:[#allocation3 + $0x18] sm:$0xff]
    %v71 = vld [vmem:[%s4] sm:$0xf]
    %v73 = vperm.slane %v71, 0
    %v74 = vperm.slane %v71, 1
    %v75 = vperm.slane %v71, 2
    %v76 = vperm.slane %v71, 3
    %v89 = vunpack.c.l.b16 %v59
    %v90 = vunpack.c.l.b16 %v60
    %v91 = vunpack.c.l.b16 %v61
    %v92 = vunpack.c.l.b16 %v62
    %v93 = vunpack.c.l.b16 %v63
    %v94 = vunpack.c.l.b16 %v64
    %v95 = vunpack.c.l.b16 %v65
    %v96 = vunpack.c.l.b16 %v66
    %v97 = vpack.c.b16 %v90, %v89
    %v98 = vpack.c.b16 %v92, %v91
    %v99 = vpack.c.b16 %v94, %v93
    %v100 = vpack.c.b16 %v96, %v95
    %v105 = vunpack.c.l.b16 %v67
    %v106 = vunpack.c.h.b16 %v67
    %v107 = vunpack.c.l.b16 %v68
    %v108 = vunpack.c.h.b16 %v68
    %v109 = vunpack.c.l.b16 %v69
    %v110 = vunpack.c.h.b16 %v69
    %v111 = vunpack.c.l.b16 %v70
    %v112 = vunpack.c.h.b16 %v70
    %v113 = vpack.c.b16 %v109, %v105
    %v114 = vpack.c.b16 %v110, %v106
    %v115 = vpack.c.b16 %v111, %v107
    %v116 = vpack.c.b16 %v112, %v108
    %vm121 = vcmask 130048
    %v123 = vsel %vm121, %v97, 0
    %v126 = vsel %vm121, %v98, 0
    %v129 = vsel %vm121, %v99, 0
    %v132 = vsel %vm121, %v100, 0
    %134 = vmatpush.bf16.msra.mxu0 0
    %135 = vmatpush.bf16.msra.mxu0 0
    %136 = vmatpush.bf16.msra.mxu0 0
    %137 = vmatpush.bf16.msra.mxu0 0
    %138 = vmatpush.bf16.msra.mxu0 0
    %139 = vmatpush.bf16.msra.mxu0 0
    %140 = vmatpush.bf16.msra.mxu0 0
    %141 = vmatpush.bf16.msra.mxu0 %v113
    %142 = vmatmul.bf16.gmra.mxu0 %v123
    %v143 = vpop.f32.mrf.mxu0
    %v144 = vadd.f32 %v73, %v143
    %v145 = vpop.f32.mrf.mxu0
    %v146 = vadd.f32 %v73, %v145
    %147 = vmatmul.bf16.gmra.mxu0 %v126
    %v148 = vpop.f32.mrf.mxu0
    %v149 = vadd.f32 %v73, %v148
    %v150 = vpop.f32.mrf.mxu0
    %v151 = vadd.f32 %v73, %v150
    %152 = vmatmul.bf16.gmra.mxu0 %v129
    %v153 = vpop.f32.mrf.mxu0
    %v154 = vadd.f32 %v73, %v153
    %v155 = vpop.f32.mrf.mxu0
    %v156 = vadd.f32 %v73, %v155
    %157 = vmatmul.bf16.gmra.mxu0 %v132
    %v158 = vpop.f32.mrf.mxu0
    %v159 = vadd.f32 %v73, %v158
    %v160 = vpop.f32.mrf.mxu0
    %v161 = vadd.f32 %v73, %v160
    %162 = vdwg.mxu0
    %163 = vmatpush.bf16.msra.mxu0 0
    %164 = vmatpush.bf16.msra.mxu0 0
    %165 = vmatpush.bf16.msra.mxu0 0
    %166 = vmatpush.bf16.msra.mxu0 0
    %167 = vmatpush.bf16.msra.mxu0 0
    %168 = vmatpush.bf16.msra.mxu0 0
    %169 = vmatpush.bf16.msra.mxu0 0
    %170 = vmatpush.bf16.msra.mxu0 %v114
    %171 = vmatmul.bf16.gmra.mxu0 %v123
    %v172 = vpop.f32.mrf.mxu0
    %v173 = vadd.f32 %v74, %v172
    %v174 = vpop.f32.mrf.mxu0
    %v175 = vadd.f32 %v74, %v174
    %176 = vmatmul.bf16.gmra.mxu0 %v126
    %v177 = vpop.f32.mrf.mxu0
    %v178 = vadd.f32 %v74, %v177
    %v179 = vpop.f32.mrf.mxu0
    %v180 = vadd.f32 %v74, %v179
    %181 = vmatmul.bf16.gmra.mxu0 %v129
    %v182 = vpop.f32.mrf.mxu0
    %v183 = vadd.f32 %v74, %v182
    %v184 = vpop.f32.mrf.mxu0
    %v185 = vadd.f32 %v74, %v184
    %186 = vmatmul.bf16.gmra.mxu0 %v132
    %v187 = vpop.f32.mrf.mxu0
    %v188 = vadd.f32 %v74, %v187
    %v189 = vpop.f32.mrf.mxu0
    %v190 = vadd.f32 %v74, %v189
    %191 = vdwg.mxu0
    %192 = vmatpush.bf16.msra.mxu0 0
    %193 = vmatpush.bf16.msra.mxu0 0
    %194 = vmatpush.bf16.msra.mxu0 0
    %195 = vmatpush.bf16.msra.mxu0 0
    %196 = vmatpush.bf16.msra.mxu0 0
    %197 = vmatpush.bf16.msra.mxu0 0
    %198 = vmatpush.bf16.msra.mxu0 0
    %199 = vmatpush.bf16.msra.mxu0 %v115
    %200 = vmatmul.bf16.gmra.mxu0 %v123
    %v201 = vpop.f32.mrf.mxu0
    %v202 = vadd.f32 %v75, %v201
    %v203 = vpop.f32.mrf.mxu0
    %v204 = vadd.f32 %v75, %v203
    %205 = vmatmul.bf16.gmra.mxu0 %v126
    %v206 = vpop.f32.mrf.mxu0
    %v207 = vadd.f32 %v75, %v206
    %v208 = vpop.f32.mrf.mxu0
    %v209 = vadd.f32 %v75, %v208
    %210 = vmatmul.bf16.gmra.mxu0 %v129
    %v211 = vpop.f32.mrf.mxu0
    %v212 = vadd.f32 %v75, %v211
    %v213 = vpop.f32.mrf.mxu0
    %v214 = vadd.f32 %v75, %v213
    %215 = vmatmul.bf16.gmra.mxu0 %v132
    %v216 = vpop.f32.mrf.mxu0
    %v217 = vadd.f32 %v75, %v216
    %v218 = vpop.f32.mrf.mxu0
    %v219 = vadd.f32 %v75, %v218
    %220 = vdwg.mxu0
    %221 = vmatpush.bf16.msra.mxu0 0
    %222 = vmatpush.bf16.msra.mxu0 0
    %223 = vmatpush.bf16.msra.mxu0 0
    %224 = vmatpush.bf16.msra.mxu0 0
    %225 = vmatpush.bf16.msra.mxu0 0
    %226 = vmatpush.bf16.msra.mxu0 0
    %227 = vmatpush.bf16.msra.mxu0 0
    %228 = vmatpush.bf16.msra.mxu0 %v116
    %229 = vmatmul.bf16.gmra.mxu0 %v123
    %v230 = vpop.f32.mrf.mxu0
    %v231 = vadd.f32 %v76, %v230
    %v232 = vpop.f32.mrf.mxu0
    %v233 = vadd.f32 %v76, %v232
    %234 = vmatmul.bf16.gmra.mxu0 %v126
    %v235 = vpop.f32.mrf.mxu0
    %v236 = vadd.f32 %v76, %v235
    %v237 = vpop.f32.mrf.mxu0
    %v238 = vadd.f32 %v76, %v237
    %239 = vmatmul.bf16.gmra.mxu0 %v129
    %v240 = vpop.f32.mrf.mxu0
    %v241 = vadd.f32 %v76, %v240
    %v242 = vpop.f32.mrf.mxu0
    %v243 = vadd.f32 %v76, %v242
    %244 = vmatmul.bf16.gmra.mxu0 %v132
    %v245 = vpop.f32.mrf.mxu0
    %v246 = vadd.f32 %v76, %v245
    %v247 = vpop.f32.mrf.mxu0
    %v248 = vadd.f32 %v76, %v247
    %249 = vdwg.mxu0
    %250 = vst [vmem:[#allocation2] sm:$0xff] %v144
    %251 = vst [vmem:[#allocation2 + $0x8] sm:$0xff] %v173
    %252 = vst [vmem:[#allocation2 + $0x10] sm:$0xff] %v202
    %253 = vst [vmem:[#allocation2 + $0x18] sm:$0xff] %v231
    %254 = vst [vmem:[#allocation2 + $0x20] sm:$0xff] %v146
    %255 = vst [vmem:[#allocation2 + $0x28] sm:$0xff] %v175
    %256 = vst [vmem:[#allocation2 + $0x30] sm:$0xff] %v204
    %257 = vst [vmem:[#allocation2 + $0x38] sm:$0xff] %v233
    %258 = vst [vmem:[#allocation2 + $0x40] sm:$0xff] %v149
    %259 = vst [vmem:[#allocation2 + $0x48] sm:$0xff] %v178
    %260 = vst [vmem:[#allocation2 + $0x50] sm:$0xff] %v207
    %261 = vst [vmem:[#allocation2 + $0x58] sm:$0xff] %v236
    %262 = vst [vmem:[#allocation2 + $0x60] sm:$0xff] %v151
    %263 = vst [vmem:[#allocation2 + $0x68] sm:$0xff] %v180
    %264 = vst [vmem:[#allocation2 + $0x70] sm:$0xff] %v209
    %265 = vst [vmem:[#allocation2 + $0x78] sm:$0xff] %v238
    %266 = vst [vmem:[#allocation2 + $0x80] sm:$0xff] %v154
    %267 = vst [vmem:[#allocation2 + $0x88] sm:$0xff] %v183
    %268 = vst [vmem:[#allocation2 + $0x90] sm:$0xff] %v212
    %269 = vst [vmem:[#allocation2 + $0x98] sm:$0xff] %v241
    %270 = vst [vmem:[#allocation2 + $0xa0] sm:$0xff] %v156
    %271 = vst [vmem:[#allocation2 + $0xa8] sm:$0xff] %v185
    %272 = vst [vmem:[#allocation2 + $0xb0] sm:$0xff] %v214
    %273 = vst [vmem:[#allocation2 + $0xb8] sm:$0xff] %v243
    %274 = vst [vmem:[#allocation2 + $0xc0] sm:$0xff] %v159
    %275 = vst [vmem:[#allocation2 + $0xc8] sm:$0xff] %v188
    %276 = vst [vmem:[#allocation2 + $0xd0] sm:$0xff] %v217
    %277 = vst [vmem:[#allocation2 + $0xd8] sm:$0xff] %v246
    %278 = vst [vmem:[#allocation2 + $0xe0] sm:$0xff] %v161
    %279 = vst [vmem:[#allocation2 + $0xe8] sm:$0xff] %v190
    %280 = vst [vmem:[#allocation2 + $0xf0] sm:$0xff] %v219
    %281 = vst [vmem:[#allocation2 + $0xf8] sm:$0xff] %v248
    %v282 = vld [vmem:[#allocation5] sm:$0xff]
    %v283 = vld [vmem:[#allocation5 + $0x8] sm:$0xff]
    %v284 = vld [vmem:[#allocation5 + $0x10] sm:$0xff]
    %v285 = vld [vmem:[#allocation5 + $0x18] sm:$0xff]
    %v286 = vld [vmem:[#allocation5 + $0x20] sm:$0xff]
    %v287 = vld [vmem:[#allocation5 + $0x28] sm:$0xff]
    %v288 = vld [vmem:[#allocation5 + $0x30] sm:$0xff]
    %v289 = vld [vmem:[#allocation5 + $0x38] sm:$0xff]
    %v290 = vld [vmem:[#allocation5 + $0x40] sm:$0xff]
    %v291 = vld [vmem:[#allocation5 + $0x48] sm:$0xff]
    %v292 = vld [vmem:[#allocation5 + $0x50] sm:$0xff]
    %v293 = vld [vmem:[#allocation5 + $0x58] sm:$0xff]
    %v294 = vld [vmem:[#allocation5 + $0x60] sm:$0xff]
    %v295 = vld [vmem:[#allocation5 + $0x68] sm:$0xff]
    %v296 = vld [vmem:[#allocation5 + $0x70] sm:$0xff]
    %v297 = vld [vmem:[#allocation5 + $0x78] sm:$0xff]
    %v298 = vld [vmem:[#allocation5 + $0x80] sm:$0xff]
    %v299 = vld [vmem:[#allocation5 + $0x88] sm:$0xff]
    %v300 = vld [vmem:[#allocation5 + $0x90] sm:$0xff]
    %v301 = vld [vmem:[#allocation5 + $0x98] sm:$0xff]
    %v302 = vld [vmem:[#allocation5 + $0xa0] sm:$0xff]
    %v303 = vld [vmem:[#allocation5 + $0xa8] sm:$0xff]
    %v304 = vld [vmem:[#allocation5 + $0xb0] sm:$0xff]
    %v305 = vld [vmem:[#allocation5 + $0xb8] sm:$0xff]
    %v306 = vld [vmem:[#allocation5 + $0xc0] sm:$0xff]
    %v307 = vld [vmem:[#allocation5 + $0xc8] sm:$0xff]
    %v308 = vld [vmem:[#allocation5 + $0xd0] sm:$0xff]
    %v309 = vld [vmem:[#allocation5 + $0xd8] sm:$0xff]
    %v310 = vld [vmem:[#allocation5 + $0xe0] sm:$0xff]
    %v311 = vld [vmem:[#allocation5 + $0xe8] sm:$0xff]
    %v312 = vld [vmem:[#allocation5 + $0xf0] sm:$0xff]
    %v313 = vld [vmem:[#allocation5 + $0xf8] sm:$0xff]
    %v314 = vld [vmem:[%s0] sm:$0xff]
    %v315 = vlaneseq
    %v316 = vand.u32 %v315, 127
    %317 = vset.pattern.permute.xlu0 0
    %318 = vperm.xlu0 %317, %v314
    %v319 = vpop.permute.xlu0 %318
    %vm320 = vcmp.lt.s32.totalorder %v316, %v319
    %v321 = vld [vmem:[#allocation2] sm:$0xff]
    %v322 = vld [vmem:[#allocation2 + $0x8] sm:$0xff]
    %v323 = vld [vmem:[#allocation2 + $0x10] sm:$0xff]
    %v324 = vld [vmem:[#allocation2 + $0x18] sm:$0xff]
    %v357 = vunpack.c.l.b16 %v282
    %v358 = vunpack.c.h.b16 %v282
    %v359 = vunpack.c.l.b16 %v283
    %v360 = vunpack.c.h.b16 %v283
    %v361 = vunpack.c.l.b16 %v284
    %v362 = vunpack.c.h.b16 %v284
    %v363 = vunpack.c.l.b16 %v285
    %v364 = vunpack.c.h.b16 %v285
    %v365 = vunpack.c.l.b16 %v286
    %v366 = vunpack.c.h.b16 %v286
    %v367 = vunpack.c.l.b16 %v287
    %v368 = vunpack.c.h.b16 %v287
    %v369 = vunpack.c.l.b16 %v288
    %v370 = vunpack.c.h.b16 %v288
    %v371 = vunpack.c.l.b16 %v289
    %v372 = vunpack.c.h.b16 %v289
    %v373 = vunpack.c.l.b16 %v290
    %v374 = vunpack.c.h.b16 %v290
    %v375 = vunpack.c.l.b16 %v291
    %v376 = vunpack.c.h.b16 %v291
    %v377 = vunpack.c.l.b16 %v292
    %v378 = vunpack.c.h.b16 %v292
    %v379 = vunpack.c.l.b16 %v293
    %v380 = vunpack.c.h.b16 %v293
    %v381 = vunpack.c.l.b16 %v294
    %v382 = vunpack.c.h.b16 %v294
    %v383 = vunpack.c.l.b16 %v295
    %v384 = vunpack.c.h.b16 %v295
    %v385 = vunpack.c.l.b16 %v296
    %v386 = vunpack.c.h.b16 %v296
    %v387 = vunpack.c.l.b16 %v297
    %v388 = vunpack.c.h.b16 %v297
    %v389 = vunpack.c.l.b16 %v298
    %v390 = vunpack.c.h.b16 %v298
    %v391 = vunpack.c.l.b16 %v299
    %v392 = vunpack.c.h.b16 %v299
    %v393 = vunpack.c.l.b16 %v300
    %v394 = vunpack.c.h.b16 %v300
    %v395 = vunpack.c.l.b16 %v301
    %v396 = vunpack.c.h.b16 %v301
    %v397 = vunpack.c.l.b16 %v302
    %v398 = vunpack.c.h.b16 %v302
    %v399 = vunpack.c.l.b16 %v303
    %v400 = vunpack.c.h.b16 %v303
    %v401 = vunpack.c.l.b16 %v304
    %v402 = vunpack.c.h.b16 %v304
    %v403 = vunpack.c.l.b16 %v305
    %v404 = vunpack.c.h.b16 %v305
    %v405 = vunpack.c.l.b16 %v306
    %v406 = vunpack.c.h.b16 %v306
    %v407 = vunpack.c.l.b16 %v307
    %v408 = vunpack.c.h.b16 %v307
    %v409 = vunpack.c.l.b16 %v308
    %v410 = vunpack.c.h.b16 %v308
    %v411 = vunpack.c.l.b16 %v309
    %v412 = vunpack.c.h.b16 %v309
    %v413 = vunpack.c.l.b16 %v310
    %v414 = vunpack.c.h.b16 %v310
    %v415 = vunpack.c.l.b16 %v311
    %v416 = vunpack.c.h.b16 %v311
    %v417 = vunpack.c.l.b16 %v312
    %v418 = vunpack.c.h.b16 %v312
    %v419 = vunpack.c.l.b16 %v313
    %v420 = vunpack.c.h.b16 %v313
    %v421 = vpack.c.b16 %v361, %v357
    %v422 = vpack.c.b16 %v362, %v358
    %v423 = vpack.c.b16 %v363, %v359
    %v424 = vpack.c.b16 %v364, %v360
    %v425 = vpack.c.b16 %v369, %v365
    %v426 = vpack.c.b16 %v370, %v366
    %v427 = vpack.c.b16 %v371, %v367
    %v428 = vpack.c.b16 %v372, %v368
    %v429 = vpack.c.b16 %v377, %v373
    %v430 = vpack.c.b16 %v378, %v374
    %v431 = vpack.c.b16 %v379, %v375
    %v432 = vpack.c.b16 %v380, %v376
    %v433 = vpack.c.b16 %v385, %v381
    %v434 = vpack.c.b16 %v386, %v382
    %v435 = vpack.c.b16 %v387, %v383
    %v436 = vpack.c.b16 %v388, %v384
    %v437 = vpack.c.b16 %v393, %v389
    %v438 = vpack.c.b16 %v394, %v390
    %v439 = vpack.c.b16 %v395, %v391
    %v440 = vpack.c.b16 %v396, %v392
    %v441 = vpack.c.b16 %v401, %v397
    %v442 = vpack.c.b16 %v402, %v398
    %v443 = vpack.c.b16 %v403, %v399
    %v444 = vpack.c.b16 %v404, %v400
    %v445 = vpack.c.b16 %v409, %v405
    %v446 = vpack.c.b16 %v410, %v406
    %v447 = vpack.c.b16 %v411, %v407
    %v448 = vpack.c.b16 %v412, %v408
    %v449 = vpack.c.b16 %v417, %v413
    %v450 = vpack.c.b16 %v418, %v414
    %v451 = vpack.c.b16 %v419, %v415
    %v452 = vpack.c.b16 %v420, %v416
    %485 = vmatpush.bf16.msra.mxu0 %v449
    %486 = vmatpush.bf16.msra.mxu0 %v445
    %487 = vmatpush.bf16.msra.mxu0 %v441
    %488 = vmatpush.bf16.msra.mxu0 %v437
    %489 = vmatpush.bf16.msra.mxu0 %v433
    %490 = vmatpush.bf16.msra.mxu0 %v429
    %491 = vmatpush.bf16.msra.mxu0 %v425
    %492 = vmatpush.bf16.msra.mxu0 %v421
    %493 = vmatmul.bf16.gmra.mxu0 0
    %v494 = vpop.f32.mrf.mxu0
    %v495 = vadd.f32 0.0, %v494
    %v496 = vpop.f32.mrf.mxu0
    %497 = vdwg.mxu0
    %498 = vmatpush.bf16.msra.mxu0 %v450
    %499 = vmatpush.bf16.msra.mxu0 %v446
    %500 = vmatpush.bf16.msra.mxu0 %v442
    %501 = vmatpush.bf16.msra.mxu0 %v438
    %502 = vmatpush.bf16.msra.mxu0 %v434
    %503 = vmatpush.bf16.msra.mxu0 %v430
    %504 = vmatpush.bf16.msra.mxu0 %v426
    %505 = vmatpush.bf16.msra.mxu0 %v422
    %506 = vmatmul.bf16.gmra.mxu0 0
    %v507 = vpop.f32.mrf.mxu0
    %v508 = vadd.f32 0.0, %v507
    %v509 = vpop.f32.mrf.mxu0
    %510 = vdwg.mxu0
    %511 = vmatpush.bf16.msra.mxu0 %v451
    %512 = vmatpush.bf16.msra.mxu0 %v447
    %513 = vmatpush.bf16.msra.mxu0 %v443
    %514 = vmatpush.bf16.msra.mxu0 %v439
    %515 = vmatpush.bf16.msra.mxu0 %v435
    %516 = vmatpush.bf16.msra.mxu0 %v431
    %517 = vmatpush.bf16.msra.mxu0 %v427
    %518 = vmatpush.bf16.msra.mxu0 %v423
    %519 = vmatmul.bf16.gmra.mxu0 0
    %v520 = vpop.f32.mrf.mxu0
    %v521 = vadd.f32 0.0, %v520
    %v522 = vpop.f32.mrf.mxu0
    %523 = vdwg.mxu0
    %524 = vmatpush.bf16.msra.mxu0 %v452
    %525 = vmatpush.bf16.msra.mxu0 %v448
    %526 = vmatpush.bf16.msra.mxu0 %v444
    %527 = vmatpush.bf16.msra.mxu0 %v440
    %528 = vmatpush.bf16.msra.mxu0 %v436
    %529 = vmatpush.bf16.msra.mxu0 %v432
    %530 = vmatpush.bf16.msra.mxu0 %v428
    %531 = vmatpush.bf16.msra.mxu0 %v424
    %532 = vmatmul.bf16.gmra.mxu0 0
    %v533 = vpop.f32.mrf.mxu0
    %v534 = vadd.f32 0.0, %v533
    %v535 = vpop.f32.mrf.mxu0
    %536 = vdwg.mxu0
    %v537 = vadd.f32 %v321, %v495
    %v538 = vadd.f32 %v322, %v508
    %v539 = vadd.f32 %v323, %v521
    %v540 = vadd.f32 %v324, %v534
    %v541 = vxor.u32 %v537, 2147483648
    %v542 = vxor.u32 %v538, 2147483648
    %v543 = vxor.u32 %v539, 2147483648
    %v544 = vmul.f32 %v541, 1.442695
    %v545 = vpow.pop %v544
    %v546 = vmul.f32 %v542, 1.442695
    %v547 = vpow.pop %v546
    %v548 = vmul.f32 %v543, 1.442695
    %v549 = vpow.pop %v548
    %v550 = vadd.f32 %v545, 1.0
    %v551 = vadd.f32 %v547, 1.0
    %v552 = vadd.f32 %v549, 1.0
    %v553 = vrcp.pop %v550
    %v554 = vmul.f32 %v550, %v553
    %v555 = vsub.f32 1.0, %v554
    %v556 = vmul.f32 %v553, %v555
    %v557 = vadd.f32 %v553, %v556
    %vm558 = vweird.f32 %v550
    %vm559 = vweird.f32 %v553
    %vm560 = vmor %vm558, %vm559
    %v561 = vsel %vm560, %v553, %v557
    %v562 = vand.u32 2147483647, %v550
    %vm563 = vcmp.eq.f32.partialorder %v562, 8.507059e+37
    %v564 = vand.u32 %v550, 2147483648
    %v565 = vor.u32 1.1754944e-38, %v564
    %v566 = vsel %vm563, %v565, %v561
    %v567 = vmul.f32 1.0, %v566
    %v568 = vrcp.pop %v551
    %v569 = vmul.f32 %v551, %v568
    %v570 = vsub.f32 1.0, %v569
    %v571 = vmul.f32 %v568, %v570
    %v572 = vadd.f32 %v568, %v571
    %vm573 = vweird.f32 %v551
    %vm574 = vweird.f32 %v568
    %vm575 = vmor %vm573, %vm574
    %v576 = vsel %vm575, %v568, %v572
    %v577 = vand.u32 2147483647, %v551
    %vm578 = vcmp.eq.f32.partialorder %v577, 8.507059e+37
    %v579 = vand.u32 %v551, 2147483648
    %v580 = vor.u32 1.1754944e-38, %v579
    %v581 = vsel %vm578, %v580, %v576
    %v582 = vmul.f32 1.0, %v581
    %v583 = vrcp.pop %v552
    %v584 = vmul.f32 %v552, %v583
    %v585 = vsub.f32 1.0, %v584
    %v586 = vmul.f32 %v583, %v585
    %v587 = vadd.f32 %v583, %v586
    %vm588 = vweird.f32 %v552
    %vm589 = vweird.f32 %v583
    %vm590 = vmor %vm588, %vm589
    %v591 = vsel %vm590, %v583, %v587
    %v592 = vand.u32 2147483647, %v552
    %vm593 = vcmp.eq.f32.partialorder %v592, 8.507059e+37
    %v594 = vand.u32 %v552, 2147483648
    %v595 = vor.u32 1.1754944e-38, %v594
    %v596 = vsel %vm593, %v595, %v591
    %v597 = vmul.f32 1.0, %v596
    %v598 = vtanh.pop %v540
    %v599 = vmul.f32 %v582, 0.0
    %v600 = vmul.f32 %v567, %v598
    %v601 = vadd.f32 %v599, %v600
    %v602 = vtanh.pop %v601
    %v603 = vmul.f32 %v597, %v602
    %v604 = vsel %vm320, 1, 0
    %605 = vset.pattern.permute.xlu0 0
    %606 = vperm.xlu0 %605, %v604
    %v607 = vpop.permute.xlu0 %606
    %vm608 = vcmp.eq.s32.totalorder %v607, 1
    %v609 = vsel %vm608, %v601, 0.0
    %v610 = vsel %vm608, %v603, 0.0
    %v611 = vld [vmem:[#allocation2 + $0x20] sm:$0xff]
    %v612 = vld [vmem:[#allocation2 + $0x28] sm:$0xff]
    %v613 = vld [vmem:[#allocation2 + $0x30] sm:$0xff]
    %v614 = vld [vmem:[#allocation2 + $0x38] sm:$0xff]
    %v615 = vpack.c.bf16 %v610, %v610
    %616 = vmatpush.bf16.msra.mxu0 %v449
    %617 = vmatpush.bf16.msra.mxu0 %v445
    %618 = vmatpush.bf16.msra.mxu0 %v441
    %619 = vmatpush.bf16.msra.mxu0 %v437
    %620 = vmatpush.bf16.msra.mxu0 %v433
    %621 = vmatpush.bf16.msra.mxu0 %v429
    %622 = vmatpush.bf16.msra.mxu0 %v425
    %623 = vmatpush.bf16.msra.mxu0 %v421
    %624 = vmatmul.bf16.gmra.mxu0 %v615
    %v625 = vpop.f32.mrf.mxu0
    %v626 = vadd.f32 0.0, %v625
    %v627 = vpop.f32.mrf.mxu0
    %628 = vdwg.mxu0
    %629 = vmatpush.bf16.msra.mxu0 %v450
    %630 = vmatpush.bf16.msra.mxu0 %v446
    %631 = vmatpush.bf16.msra.mxu0 %v442
    %632 = vmatpush.bf16.msra.mxu0 %v438
    %633 = vmatpush.bf16.msra.mxu0 %v434
    %634 = vmatpush.bf16.msra.mxu0 %v430
    %635 = vmatpush.bf16.msra.mxu0 %v426
    %636 = vmatpush.bf16.msra.mxu0 %v422
    %637 = vmatmul.bf16.gmra.mxu0 %v615
    %v638 = vpop.f32.mrf.mxu0
    %v639 = vadd.f32 0.0, %v638
    %v640 = vpop.f32.mrf.mxu0
    %641 = vdwg.mxu0
    %642 = vmatpush.bf16.msra.mxu0 %v451
    %643 = vmatpush.bf16.msra.mxu0 %v447
    %644 = vmatpush.bf16.msra.mxu0 %v443
    %645 = vmatpush.bf16.msra.mxu0 %v439
    %646 = vmatpush.bf16.msra.mxu0 %v435
    %647 = vmatpush.bf16.msra.mxu0 %v431
    %648 = vmatpush.bf16.msra.mxu0 %v427
    %649 = vmatpush.bf16.msra.mxu0 %v423
    %650 = vmatmul.bf16.gmra.mxu0 %v615
    %v651 = vpop.f32.mrf.mxu0
    %v652 = vadd.f32 0.0, %v651
    %v653 = vpop.f32.mrf.mxu0
    %654 = vdwg.mxu0
    %655 = vmatpush.bf16.msra.mxu0 %v452
    %656 = vmatpush.bf16.msra.mxu0 %v448
    %657 = vmatpush.bf16.msra.mxu0 %v444
    %658 = vmatpush.bf16.msra.mxu0 %v440
    %659 = vmatpush.bf16.msra.mxu0 %v436
    %660 = vmatpush.bf16.msra.mxu0 %v432
    %661 = vmatpush.bf16.msra.mxu0 %v428
    %662 = vmatpush.bf16.msra.mxu0 %v424
    %663 = vmatmul.bf16.gmra.mxu0 %v615
    %v664 = vpop.f32.mrf.mxu0
    %v665 = vadd.f32 0.0, %v664
    %v666 = vpop.f32.mrf.mxu0
    %667 = vdwg.mxu0
    %v668 = vadd.f32 %v611, %v626
    %v669 = vadd.f32 %v612, %v639
    %v670 = vadd.f32 %v613, %v652
    %v671 = vadd.f32 %v614, %v665
    %v672 = vxor.u32 %v668, 2147483648
    %v673 = vxor.u32 %v669, 2147483648
    %v674 = vxor.u32 %v670, 2147483648
    %v675 = vmul.f32 %v672, 1.442695
    %v676 = vpow.pop %v675
    %v677 = vmul.f32 %v673, 1.442695
    %v678 = vpow.pop %v677
    %v679 = vmul.f32 %v674, 1.442695
    %v680 = vpow.pop %v679
    %v681 = vadd.f32 %v676, 1.0
    %v682 = vadd.f32 %v678, 1.0
    %v683 = vadd.f32 %v680, 1.0
    %v684 = vrcp.pop %v681
    %v685 = vmul.f32 %v681, %v684
    %v686 = vsub.f32 1.0, %v685
    %v687 = vmul.f32 %v684, %v686
    %v688 = vadd.f32 %v684, %v687
    %vm689 = vweird.f32 %v681
    %vm690 = vweird.f32 %v684
    %vm691 = vmor %vm689, %vm690
    %v692 = vsel %vm691, %v684, %v688
    %v693 = vand.u32 2147483647, %v681
    %vm694 = vcmp.eq.f32.partialorder %v693, 8.507059e+37
    %v695 = vand.u32 %v681, 2147483648
    %v696 = vor.u32 1.1754944e-38, %v695
    %v697 = vsel %vm694, %v696, %v692
    %v698 = vmul.f32 1.0, %v697
    %v699 = vrcp.pop %v682
    %v700 = vmul.f32 %v682, %v699
    %v701 = vsub.f32 1.0, %v700
    %v702 = vmul.f32 %v699, %v701
    %v703 = vadd.f32 %v699, %v702
    %vm704 = vweird.f32 %v682
    %vm705 = vweird.f32 %v699
    %vm706 = vmor %vm704, %vm705
    %v707 = vsel %vm706, %v699, %v703
    %v708 = vand.u32 2147483647, %v682
    %vm709 = vcmp.eq.f32.partialorder %v708, 8.507059e+37
    %v710 = vand.u32 %v682, 2147483648
    %v711 = vor.u32 1.1754944e-38, %v710
    %v712 = vsel %vm709, %v711, %v707
    %v713 = vmul.f32 1.0, %v712
    %v714 = vrcp.pop %v683
    %v715 = vmul.f32 %v683, %v714
    %v716 = vsub.f32 1.0, %v715
    %v717 = vmul.f32 %v714, %v716
    %v718 = vadd.f32 %v714, %v717
    %vm719 = vweird.f32 %v683
    %vm720 = vweird.f32 %v714
    %vm721 = vmor %vm719, %vm720
    %v722 = vsel %vm721, %v714, %v718
    %v723 = vand.u32 2147483647, %v683
    %vm724 = vcmp.eq.f32.partialorder %v723, 8.507059e+37
    %v725 = vand.u32 %v683, 2147483648
    %v726 = vor.u32 1.1754944e-38, %v725
    %v727 = vsel %vm724, %v726, %v722
    %v728 = vmul.f32 1.0, %v727
    %v729 = vtanh.pop %v671
    %v730 = vmul.f32 %v713, %v609
    %v731 = vmul.f32 %v698, %v729
    %v732 = vadd.f32 %v730, %v731
    %v733 = vtanh.pop %v732
    %v734 = vmul.f32 %v728, %v733
    %735 = vset.pattern.permute.xlu0 1
    %736 = vperm.xlu0 %735, %v604
    %v737 = vpop.permute.xlu0 %736
    %vm738 = vcmp.eq.s32.totalorder %v737, 1
    %v739 = vsel %vm738, %v732, %v609
    %v740 = vsel %vm738, %v734, %v610
    %v741 = vld [vmem:[#allocation2 + $0x40] sm:$0xff]
    %v742 = vld [vmem:[#allocation2 + $0x48] sm:$0xff]
    %v743 = vld [vmem:[#allocation2 + $0x50] sm:$0xff]
    %v744 = vld [vmem:[#allocation2 + $0x58] sm:$0xff]
    %v745 = vpack.c.bf16 %v740, %v740
    %746 = vmatpush.bf16.msra.mxu0 %v449
    %747 = vmatpush.bf16.msra.mxu0 %v445
    %748 = vmatpush.bf16.msra.mxu0 %v441
    %749 = vmatpush.bf16.msra.mxu0 %v437
    %750 = vmatpush.bf16.msra.mxu0 %v433
    %751 = vmatpush.bf16.msra.mxu0 %v429
    %752 = vmatpush.bf16.msra.mxu0 %v425
    %753 = vmatpush.bf16.msra.mxu0 %v421
    %754 = vmatmul.bf16.gmra.mxu0 %v745
    %v755 = vpop.f32.mrf.mxu0
    %v756 = vadd.f32 0.0, %v755
    %v757 = vpop.f32.mrf.mxu0
    %758 = vdwg.mxu0
    %759 = vmatpush.bf16.msra.mxu0 %v450
    %760 = vmatpush.bf16.msra.mxu0 %v446
    %761 = vmatpush.bf16.msra.mxu0 %v442
    %762 = vmatpush.bf16.msra.mxu0 %v438
    %763 = vmatpush.bf16.msra.mxu0 %v434
    %764 = vmatpush.bf16.msra.mxu0 %v430
    %765 = vmatpush.bf16.msra.mxu0 %v426
    %766 = vmatpush.bf16.msra.mxu0 %v422
    %767 = vmatmul.bf16.gmra.mxu0 %v745
    %v768 = vpop.f32.mrf.mxu0
    %v769 = vadd.f32 0.0, %v768
    %v770 = vpop.f32.mrf.mxu0
    %771 = vdwg.mxu0
    %772 = vmatpush.bf16.msra.mxu0 %v451
    %773 = vmatpush.bf16.msra.mxu0 %v447
    %774 = vmatpush.bf16.msra.mxu0 %v443
    %775 = vmatpush.bf16.msra.mxu0 %v439
    %776 = vmatpush.bf16.msra.mxu0 %v435
    %777 = vmatpush.bf16.msra.mxu0 %v431
    %778 = vmatpush.bf16.msra.mxu0 %v427
    %779 = vmatpush.bf16.msra.mxu0 %v423
    %780 = vmatmul.bf16.gmra.mxu0 %v745
    %v781 = vpop.f32.mrf.mxu0
    %v782 = vadd.f32 0.0, %v781
    %v783 = vpop.f32.mrf.mxu0
    %784 = vdwg.mxu0
    %785 = vmatpush.bf16.msra.mxu0 %v452
    %786 = vmatpush.bf16.msra.mxu0 %v448
    %787 = vmatpush.bf16.msra.mxu0 %v444
    %788 = vmatpush.bf16.msra.mxu0 %v440
    %789 = vmatpush.bf16.msra.mxu0 %v436
    %790 = vmatpush.bf16.msra.mxu0 %v432
    %791 = vmatpush.bf16.msra.mxu0 %v428
    %792 = vmatpush.bf16.msra.mxu0 %v424
    %793 = vmatmul.bf16.gmra.mxu0 %v745
    %v794 = vpop.f32.mrf.mxu0
    %v795 = vadd.f32 0.0, %v794
    %v796 = vpop.f32.mrf.mxu0
    %797 = vdwg.mxu0
    %v798 = vadd.f32 %v741, %v756
    %v799 = vadd.f32 %v742, %v769
    %v800 = vadd.f32 %v743, %v782
    %v801 = vadd.f32 %v744, %v795
    %v802 = vxor.u32 %v798, 2147483648
    %v803 = vxor.u32 %v799, 2147483648
    %v804 = vxor.u32 %v800, 2147483648
    %v805 = vmul.f32 %v802, 1.442695
    %v806 = vpow.pop %v805
    %v807 = vmul.f32 %v803, 1.442695
    %v808 = vpow.pop %v807
    %v809 = vmul.f32 %v804, 1.442695
    %v810 = vpow.pop %v809
    %v811 = vadd.f32 %v806, 1.0
    %v812 = vadd.f32 %v808, 1.0
    %v813 = vadd.f32 %v810, 1.0
    %v814 = vrcp.pop %v811
    %v815 = vmul.f32 %v811, %v814
    %v816 = vsub.f32 1.0, %v815
    %v817 = vmul.f32 %v814, %v816
    %v818 = vadd.f32 %v814, %v817
    %vm819 = vweird.f32 %v811
    %vm820 = vweird.f32 %v814
    %vm821 = vmor %vm819, %vm820
    %v822 = vsel %vm821, %v814, %v818
    %v823 = vand.u32 2147483647, %v811
    %vm824 = vcmp.eq.f32.partialorder %v823, 8.507059e+37
    %v825 = vand.u32 %v811, 2147483648
    %v826 = vor.u32 1.1754944e-38, %v825
    %v827 = vsel %vm824, %v826, %v822
    %v828 = vmul.f32 1.0, %v827
    %v829 = vrcp.pop %v812
    %v830 = vmul.f32 %v812, %v829
    %v831 = vsub.f32 1.0, %v830
    %v832 = vmul.f32 %v829, %v831
    %v833 = vadd.f32 %v829, %v832
    %vm834 = vweird.f32 %v812
    %vm835 = vweird.f32 %v829
    %vm836 = vmor %vm834, %vm835
    %v837 = vsel %vm836, %v829, %v833
    %v838 = vand.u32 2147483647, %v812
    %vm839 = vcmp.eq.f32.partialorder %v838, 8.507059e+37
    %v840 = vand.u32 %v812, 2147483648
    %v841 = vor.u32 1.1754944e-38, %v840
    %v842 = vsel %vm839, %v841, %v837
    %v843 = vmul.f32 1.0, %v842
    %v844 = vrcp.pop %v813
    %v845 = vmul.f32 %v813, %v844
    %v846 = vsub.f32 1.0, %v845
    %v847 = vmul.f32 %v844, %v846
    %v848 = vadd.f32 %v844, %v847
    %vm849 = vweird.f32 %v813
    %vm850 = vweird.f32 %v844
    %vm851 = vmor %vm849, %vm850
    %v852 = vsel %vm851, %v844, %v848
    %v853 = vand.u32 2147483647, %v813
    %vm854 = vcmp.eq.f32.partialorder %v853, 8.507059e+37
    %v855 = vand.u32 %v813, 2147483648
    %v856 = vor.u32 1.1754944e-38, %v855
    %v857 = vsel %vm854, %v856, %v852
    %v858 = vmul.f32 1.0, %v857
    %v859 = vtanh.pop %v801
    %v860 = vmul.f32 %v843, %v739
    %v861 = vmul.f32 %v828, %v859
    %v862 = vadd.f32 %v860, %v861
    %v863 = vtanh.pop %v862
    %v864 = vmul.f32 %v858, %v863
    %865 = vset.pattern.permute.xlu0 2
    %866 = vperm.xlu0 %865, %v604
    %v867 = vpop.permute.xlu0 %866
    %vm868 = vcmp.eq.s32.totalorder %v867, 1
    %v869 = vsel %vm868, %v862, %v739
    %v870 = vsel %vm868, %v864, %v740
    %v871 = vld [vmem:[#allocation2 + $0x60] sm:$0xff]
    %v872 = vld [vmem:[#allocation2 + $0x68] sm:$0xff]
    %v873 = vld [vmem:[#allocation2 + $0x70] sm:$0xff]
    %v874 = vld [vmem:[#allocation2 + $0x78] sm:$0xff]
    %v875 = vpack.c.bf16 %v870, %v870
    %876 = vmatpush.bf16.msra.mxu0 %v449
    %877 = vmatpush.bf16.msra.mxu0 %v445
    %878 = vmatpush.bf16.msra.mxu0 %v441
    %879 = vmatpush.bf16.msra.mxu0 %v437
    %880 = vmatpush.bf16.msra.mxu0 %v433
    %881 = vmatpush.bf16.msra.mxu0 %v429
    %882 = vmatpush.bf16.msra.mxu0 %v425
    %883 = vmatpush.bf16.msra.mxu0 %v421
    %884 = vmatmul.bf16.gmra.mxu0 %v875
    %v885 = vpop.f32.mrf.mxu0
    %v886 = vadd.f32 0.0, %v885
    %v887 = vpop.f32.mrf.mxu0
    %888 = vdwg.mxu0
    %889 = vmatpush.bf16.msra.mxu0 %v450
    %890 = vmatpush.bf16.msra.mxu0 %v446
    %891 = vmatpush.bf16.msra.mxu0 %v442
    %892 = vmatpush.bf16.msra.mxu0 %v438
    %893 = vmatpush.bf16.msra.mxu0 %v434
    %894 = vmatpush.bf16.msra.mxu0 %v430
    %895 = vmatpush.bf16.msra.mxu0 %v426
    %896 = vmatpush.bf16.msra.mxu0 %v422
    %897 = vmatmul.bf16.gmra.mxu0 %v875
    %v898 = vpop.f32.mrf.mxu0
    %v899 = vadd.f32 0.0, %v898
    %v900 = vpop.f32.mrf.mxu0
    %901 = vdwg.mxu0
    %902 = vmatpush.bf16.msra.mxu0 %v451
    %903 = vmatpush.bf16.msra.mxu0 %v447
    %904 = vmatpush.bf16.msra.mxu0 %v443
    %905 = vmatpush.bf16.msra.mxu0 %v439
    %906 = vmatpush.bf16.msra.mxu0 %v435
    %907 = vmatpush.bf16.msra.mxu0 %v431
    %908 = vmatpush.bf16.msra.mxu0 %v427
    %909 = vmatpush.bf16.msra.mxu0 %v423
    %910 = vmatmul.bf16.gmra.mxu0 %v875
    %v911 = vpop.f32.mrf.mxu0
    %v912 = vadd.f32 0.0, %v911
    %v913 = vpop.f32.mrf.mxu0
    %914 = vdwg.mxu0
    %915 = vmatpush.bf16.msra.mxu0 %v452
    %916 = vmatpush.bf16.msra.mxu0 %v448
    %917 = vmatpush.bf16.msra.mxu0 %v444
    %918 = vmatpush.bf16.msra.mxu0 %v440
    %919 = vmatpush.bf16.msra.mxu0 %v436
    %920 = vmatpush.bf16.msra.mxu0 %v432
    %921 = vmatpush.bf16.msra.mxu0 %v428
    %922 = vmatpush.bf16.msra.mxu0 %v424
    %923 = vmatmul.bf16.gmra.mxu0 %v875
    %v924 = vpop.f32.mrf.mxu0
    %v925 = vadd.f32 0.0, %v924
    %v926 = vpop.f32.mrf.mxu0
    %927 = vdwg.mxu0
    %v928 = vadd.f32 %v871, %v886
    %v929 = vadd.f32 %v872, %v899
    %v930 = vadd.f32 %v873, %v912
    %v931 = vadd.f32 %v874, %v925
    %v932 = vxor.u32 %v928, 2147483648
    %v933 = vxor.u32 %v929, 2147483648
    %v934 = vxor.u32 %v930, 2147483648
    %v935 = vmul.f32 %v932, 1.442695
    %v936 = vpow.pop %v935
    %v937 = vmul.f32 %v933, 1.442695
    %v938 = vpow.pop %v937
    %v939 = vmul.f32 %v934, 1.442695
    %v940 = vpow.pop %v939
    %v941 = vadd.f32 %v936, 1.0
    %v942 = vadd.f32 %v938, 1.0
    %v943 = vadd.f32 %v940, 1.0
    %v944 = vrcp.pop %v941
    %v945 = vmul.f32 %v941, %v944
    %v946 = vsub.f32 1.0, %v945
    %v947 = vmul.f32 %v944, %v946
    %v948 = vadd.f32 %v944, %v947
    %vm949 = vweird.f32 %v941
    %vm950 = vweird.f32 %v944
    %vm951 = vmor %vm949, %vm950
    %v952 = vsel %vm951, %v944, %v948
    %v953 = vand.u32 2147483647, %v941
    %vm954 = vcmp.eq.f32.partialorder %v953, 8.507059e+37
    %v955 = vand.u32 %v941, 2147483648
    %v956 = vor.u32 1.1754944e-38, %v955
    %v957 = vsel %vm954, %v956, %v952
    %v958 = vmul.f32 1.0, %v957
    %v959 = vrcp.pop %v942
    %v960 = vmul.f32 %v942, %v959
    %v961 = vsub.f32 1.0, %v960
    %v962 = vmul.f32 %v959, %v961
    %v963 = vadd.f32 %v959, %v962
    %vm964 = vweird.f32 %v942
    %vm965 = vweird.f32 %v959
    %vm966 = vmor %vm964, %vm965
    %v967 = vsel %vm966, %v959, %v963
    %v968 = vand.u32 2147483647, %v942
    %vm969 = vcmp.eq.f32.partialorder %v968, 8.507059e+37
    %v970 = vand.u32 %v942, 2147483648
    %v971 = vor.u32 1.1754944e-38, %v970
    %v972 = vsel %vm969, %v971, %v967
    %v973 = vmul.f32 1.0, %v972
    %v974 = vrcp.pop %v943
    %v975 = vmul.f32 %v943, %v974
    %v976 = vsub.f32 1.0, %v975
    %v977 = vmul.f32 %v974, %v976
    %v978 = vadd.f32 %v974, %v977
    %vm979 = vweird.f32 %v943
    %vm980 = vweird.f32 %v974
    %vm981 = vmor %vm979, %vm980
    %v982 = vsel %vm981, %v974, %v978
    %v983 = vand.u32 2147483647, %v943
    %vm984 = vcmp.eq.f32.partialorder %v983, 8.507059e+37
    %v985 = vand.u32 %v943, 2147483648
    %v986 = vor.u32 1.1754944e-38, %v985
    %v987 = vsel %vm984, %v986, %v982
    %v988 = vmul.f32 1.0, %v987
    %v989 = vtanh.pop %v931
    %v990 = vmul.f32 %v973, %v869
    %v991 = vmul.f32 %v958, %v989
    %v992 = vadd.f32 %v990, %v991
    %v993 = vtanh.pop %v992
    %v994 = vmul.f32 %v988, %v993
    %995 = vset.pattern.permute.xlu0 3
    %996 = vperm.xlu0 %995, %v604
    %v997 = vpop.permute.xlu0 %996
    %vm998 = vcmp.eq.s32.totalorder %v997, 1
    %v999 = vsel %vm998, %v992, %v869
    %v1000 = vsel %vm998, %v994, %v870
    %v1001 = vld [vmem:[#allocation2 + $0x80] sm:$0xff]
    %v1002 = vld [vmem:[#allocation2 + $0x88] sm:$0xff]
    %v1003 = vld [vmem:[#allocation2 + $0x90] sm:$0xff]
    %v1004 = vld [vmem:[#allocation2 + $0x98] sm:$0xff]
    %v1005 = vpack.c.bf16 %v1000, %v1000
    %1006 = vmatpush.bf16.msra.mxu0 %v449
    %1007 = vmatpush.bf16.msra.mxu0 %v445
    %1008 = vmatpush.bf16.msra.mxu0 %v441
    %1009 = vmatpush.bf16.msra.mxu0 %v437
    %1010 = vmatpush.bf16.msra.mxu0 %v433
    %1011 = vmatpush.bf16.msra.mxu0 %v429
    %1012 = vmatpush.bf16.msra.mxu0 %v425
    %1013 = vmatpush.bf16.msra.mxu0 %v421
    %1014 = vmatmul.bf16.gmra.mxu0 %v1005
    %v1015 = vpop.f32.mrf.mxu0
    %v1016 = vadd.f32 0.0, %v1015
    %v1017 = vpop.f32.mrf.mxu0
    %1018 = vdwg.mxu0
    %1019 = vmatpush.bf16.msra.mxu0 %v450
    %1020 = vmatpush.bf16.msra.mxu0 %v446
    %1021 = vmatpush.bf16.msra.mxu0 %v442
    %1022 = vmatpush.bf16.msra.mxu0 %v438
    %1023 = vmatpush.bf16.msra.mxu0 %v434
    %1024 = vmatpush.bf16.msra.mxu0 %v430
    %1025 = vmatpush.bf16.msra.mxu0 %v426
    %1026 = vmatpush.bf16.msra.mxu0 %v422
    %1027 = vmatmul.bf16.gmra.mxu0 %v1005
    %v1028 = vpop.f32.mrf.mxu0
    %v1029 = vadd.f32 0.0, %v1028
    %v1030 = vpop.f32.mrf.mxu0
    %1031 = vdwg.mxu0
    %1032 = vmatpush.bf16.msra.mxu0 %v451
    %1033 = vmatpush.bf16.msra.mxu0 %v447
    %1034 = vmatpush.bf16.msra.mxu0 %v443
    %1035 = vmatpush.bf16.msra.mxu0 %v439
    %1036 = vmatpush.bf16.msra.mxu0 %v435
    %1037 = vmatpush.bf16.msra.mxu0 %v431
    %1038 = vmatpush.bf16.msra.mxu0 %v427
    %1039 = vmatpush.bf16.msra.mxu0 %v423
    %1040 = vmatmul.bf16.gmra.mxu0 %v1005
    %v1041 = vpop.f32.mrf.mxu0
    %v1042 = vadd.f32 0.0, %v1041
    %v1043 = vpop.f32.mrf.mxu0
    %1044 = vdwg.mxu0
    %1045 = vmatpush.bf16.msra.mxu0 %v452
    %1046 = vmatpush.bf16.msra.mxu0 %v448
    %1047 = vmatpush.bf16.msra.mxu0 %v444
    %1048 = vmatpush.bf16.msra.mxu0 %v440
    %1049 = vmatpush.bf16.msra.mxu0 %v436
    %1050 = vmatpush.bf16.msra.mxu0 %v432
    %1051 = vmatpush.bf16.msra.mxu0 %v428
    %1052 = vmatpush.bf16.msra.mxu0 %v424
    %1053 = vmatmul.bf16.gmra.mxu0 %v1005
    %v1054 = vpop.f32.mrf.mxu0
    %v1055 = vadd.f32 0.0, %v1054
    %v1056 = vpop.f32.mrf.mxu0
    %1057 = vdwg.mxu0
    %v1058 = vadd.f32 %v1001, %v1016
    %v1059 = vadd.f32 %v1002, %v1029
    %v1060 = vadd.f32 %v1003, %v1042
    %v1061 = vadd.f32 %v1004, %v1055
    %v1062 = vxor.u32 %v1058, 2147483648
    %v1063 = vxor.u32 %v1059, 2147483648
    %v1064 = vxor.u32 %v1060, 2147483648
    %v1065 = vmul.f32 %v1062, 1.442695
    %v1066 = vpow.pop %v1065
    %v1067 = vmul.f32 %v1063, 1.442695
    %v1068 = vpow.pop %v1067
    %v1069 = vmul.f32 %v1064, 1.442695
    %v1070 = vpow.pop %v1069
    %v1071 = vadd.f32 %v1066, 1.0
    %v1072 = vadd.f32 %v1068, 1.0
    %v1073 = vadd.f32 %v1070, 1.0
    %v1074 = vrcp.pop %v1071
    %v1075 = vmul.f32 %v1071, %v1074
    %v1076 = vsub.f32 1.0, %v1075
    %v1077 = vmul.f32 %v1074, %v1076
    %v1078 = vadd.f32 %v1074, %v1077
    %vm1079 = vweird.f32 %v1071
    %vm1080 = vweird.f32 %v1074
    %vm1081 = vmor %vm1079, %vm1080
    %v1082 = vsel %vm1081, %v1074, %v1078
    %v1083 = vand.u32 2147483647, %v1071
    %vm1084 = vcmp.eq.f32.partialorder %v1083, 8.507059e+37
    %v1085 = vand.u32 %v1071, 2147483648
    %v1086 = vor.u32 1.1754944e-38, %v1085
    %v1087 = vsel %vm1084, %v1086, %v1082
    %v1088 = vmul.f32 1.0, %v1087
    %v1089 = vrcp.pop %v1072
    %v1090 = vmul.f32 %v1072, %v1089
    %v1091 = vsub.f32 1.0, %v1090
    %v1092 = vmul.f32 %v1089, %v1091
    %v1093 = vadd.f32 %v1089, %v1092
    %vm1094 = vweird.f32 %v1072
    %vm1095 = vweird.f32 %v1089
    %vm1096 = vmor %vm1094, %vm1095
    %v1097 = vsel %vm1096, %v1089, %v1093
    %v1098 = vand.u32 2147483647, %v1072
    %vm1099 = vcmp.eq.f32.partialorder %v1098, 8.507059e+37
    %v1100 = vand.u32 %v1072, 2147483648
    %v1101 = vor.u32 1.1754944e-38, %v1100
    %v1102 = vsel %vm1099, %v1101, %v1097
    %v1103 = vmul.f32 1.0, %v1102
    %v1104 = vrcp.pop %v1073
    %v1105 = vmul.f32 %v1073, %v1104
    %v1106 = vsub.f32 1.0, %v1105
    %v1107 = vmul.f32 %v1104, %v1106
    %v1108 = vadd.f32 %v1104, %v1107
    %vm1109 = vweird.f32 %v1073
    %vm1110 = vweird.f32 %v1104
    %vm1111 = vmor %vm1109, %vm1110
    %v1112 = vsel %vm1111, %v1104, %v1108
    %v1113 = vand.u32 2147483647, %v1073
    %vm1114 = vcmp.eq.f32.partialorder %v1113, 8.507059e+37
    %v1115 = vand.u32 %v1073, 2147483648
    %v1116 = vor.u32 1.1754944e-38, %v1115
    %v1117 = vsel %vm1114, %v1116, %v1112
    %v1118 = vmul.f32 1.0, %v1117
    %v1119 = vtanh.pop %v1061
    %v1120 = vmul.f32 %v1103, %v999
    %v1121 = vmul.f32 %v1088, %v1119
    %v1122 = vadd.f32 %v1120, %v1121
    %v1123 = vtanh.pop %v1122
    %v1124 = vmul.f32 %v1118, %v1123
    %1125 = vset.pattern.permute.xlu0 4
    %1126 = vperm.xlu0 %1125, %v604
    %v1127 = vpop.permute.xlu0 %1126
    %vm1128 = vcmp.eq.s32.totalorder %v1127, 1
    %v1129 = vsel %vm1128, %v1122, %v999
    %v1130 = vsel %vm1128, %v1124, %v1000
    %v1131 = vld [vmem:[#allocation2 + $0xa0] sm:$0xff]
    %v1132 = vld [vmem:[#allocation2 + $0xa8] sm:$0xff]
    %v1133 = vld [vmem:[#allocation2 + $0xb0] sm:$0xff]
    %v1134 = vld [vmem:[#allocation2 + $0xb8] sm:$0xff]
    %v1135 = vpack.c.bf16 %v1130, %v1130
    %1136 = vmatpush.bf16.msra.mxu0 %v449
    %1137 = vmatpush.bf16.msra.mxu0 %v445
    %1138 = vmatpush.bf16.msra.mxu0 %v441
    %1139 = vmatpush.bf16.msra.mxu0 %v437
    %1140 = vmatpush.bf16.msra.mxu0 %v433
    %1141 = vmatpush.bf16.msra.mxu0 %v429
    %1142 = vmatpush.bf16.msra.mxu0 %v425
    %1143 = vmatpush.bf16.msra.mxu0 %v421
    %1144 = vmatmul.bf16.gmra.mxu0 %v1135
    %v1145 = vpop.f32.mrf.mxu0
    %v1146 = vadd.f32 0.0, %v1145
    %v1147 = vpop.f32.mrf.mxu0
    %1148 = vdwg.mxu0
    %1149 = vmatpush.bf16.msra.mxu0 %v450
    %1150 = vmatpush.bf16.msra.mxu0 %v446
    %1151 = vmatpush.bf16.msra.mxu0 %v442
    %1152 = vmatpush.bf16.msra.mxu0 %v438
    %1153 = vmatpush.bf16.msra.mxu0 %v434
    %1154 = vmatpush.bf16.msra.mxu0 %v430
    %1155 = vmatpush.bf16.msra.mxu0 %v426
    %1156 = vmatpush.bf16.msra.mxu0 %v422
    %1157 = vmatmul.bf16.gmra.mxu0 %v1135
    %v1158 = vpop.f32.mrf.mxu0
    %v1159 = vadd.f32 0.0, %v1158
    %v1160 = vpop.f32.mrf.mxu0
    %1161 = vdwg.mxu0
    %1162 = vmatpush.bf16.msra.mxu0 %v451
    %1163 = vmatpush.bf16.msra.mxu0 %v447
    %1164 = vmatpush.bf16.msra.mxu0 %v443
    %1165 = vmatpush.bf16.msra.mxu0 %v439
    %1166 = vmatpush.bf16.msra.mxu0 %v435
    %1167 = vmatpush.bf16.msra.mxu0 %v431
    %1168 = vmatpush.bf16.msra.mxu0 %v427
    %1169 = vmatpush.bf16.msra.mxu0 %v423
    %1170 = vmatmul.bf16.gmra.mxu0 %v1135
    %v1171 = vpop.f32.mrf.mxu0
    %v1172 = vadd.f32 0.0, %v1171
    %v1173 = vpop.f32.mrf.mxu0
    %1174 = vdwg.mxu0
    %1175 = vmatpush.bf16.msra.mxu0 %v452
    %1176 = vmatpush.bf16.msra.mxu0 %v448
    %1177 = vmatpush.bf16.msra.mxu0 %v444
    %1178 = vmatpush.bf16.msra.mxu0 %v440
    %1179 = vmatpush.bf16.msra.mxu0 %v436
    %1180 = vmatpush.bf16.msra.mxu0 %v432
    %1181 = vmatpush.bf16.msra.mxu0 %v428
    %1182 = vmatpush.bf16.msra.mxu0 %v424
    %1183 = vmatmul.bf16.gmra.mxu0 %v1135
    %v1184 = vpop.f32.mrf.mxu0
    %v1185 = vadd.f32 0.0, %v1184
    %v1186 = vpop.f32.mrf.mxu0
    %1187 = vdwg.mxu0
    %v1188 = vadd.f32 %v1131, %v1146
    %v1189 = vadd.f32 %v1132, %v1159
    %v1190 = vadd.f32 %v1133, %v1172
    %v1191 = vadd.f32 %v1134, %v1185
    %v1192 = vxor.u32 %v1188, 2147483648
    %v1193 = vxor.u32 %v1189, 2147483648
    %v1194 = vxor.u32 %v1190, 2147483648
    %v1195 = vmul.f32 %v1192, 1.442695
    %v1196 = vpow.pop %v1195
    %v1197 = vmul.f32 %v1193, 1.442695
    %v1198 = vpow.pop %v1197
    %v1199 = vmul.f32 %v1194, 1.442695
    %v1200 = vpow.pop %v1199
    %v1201 = vadd.f32 %v1196, 1.0
    %v1202 = vadd.f32 %v1198, 1.0
    %v1203 = vadd.f32 %v1200, 1.0
    %v1204 = vrcp.pop %v1201
    %v1205 = vmul.f32 %v1201, %v1204
    %v1206 = vsub.f32 1.0, %v1205
    %v1207 = vmul.f32 %v1204, %v1206
    %v1208 = vadd.f32 %v1204, %v1207
    %vm1209 = vweird.f32 %v1201
    %vm1210 = vweird.f32 %v1204
    %vm1211 = vmor %vm1209, %vm1210
    %v1212 = vsel %vm1211, %v1204, %v1208
    %v1213 = vand.u32 2147483647, %v1201
    %vm1214 = vcmp.eq.f32.partialorder %v1213, 8.507059e+37
    %v1215 = vand.u32 %v1201, 2147483648
    %v1216 = vor.u32 1.1754944e-38, %v1215
    %v1217 = vsel %vm1214, %v1216, %v1212
    %v1218 = vmul.f32 1.0, %v1217
    %v1219 = vrcp.pop %v1202
    %v1220 = vmul.f32 %v1202, %v1219
    %v1221 = vsub.f32 1.0, %v1220
    %v1222 = vmul.f32 %v1219, %v1221
    %v1223 = vadd.f32 %v1219, %v1222
    %vm1224 = vweird.f32 %v1202
    %vm1225 = vweird.f32 %v1219
    %vm1226 = vmor %vm1224, %vm1225
    %v1227 = vsel %vm1226, %v1219, %v1223
    %v1228 = vand.u32 2147483647, %v1202
    %vm1229 = vcmp.eq.f32.partialorder %v1228, 8.507059e+37
    %v1230 = vand.u32 %v1202, 2147483648
    %v1231 = vor.u32 1.1754944e-38, %v1230
    %v1232 = vsel %vm1229, %v1231, %v1227
    %v1233 = vmul.f32 1.0, %v1232
    %v1234 = vrcp.pop %v1203
    %v1235 = vmul.f32 %v1203, %v1234
    %v1236 = vsub.f32 1.0, %v1235
    %v1237 = vmul.f32 %v1234, %v1236
    %v1238 = vadd.f32 %v1234, %v1237
    %vm1239 = vweird.f32 %v1203
    %vm1240 = vweird.f32 %v1234
    %vm1241 = vmor %vm1239, %vm1240
    %v1242 = vsel %vm1241, %v1234, %v1238
    %v1243 = vand.u32 2147483647, %v1203
    %vm1244 = vcmp.eq.f32.partialorder %v1243, 8.507059e+37
    %v1245 = vand.u32 %v1203, 2147483648
    %v1246 = vor.u32 1.1754944e-38, %v1245
    %v1247 = vsel %vm1244, %v1246, %v1242
    %v1248 = vmul.f32 1.0, %v1247
    %v1249 = vtanh.pop %v1191
    %v1250 = vmul.f32 %v1233, %v1129
    %v1251 = vmul.f32 %v1218, %v1249
    %v1252 = vadd.f32 %v1250, %v1251
    %v1253 = vtanh.pop %v1252
    %v1254 = vmul.f32 %v1248, %v1253
    %1255 = vset.pattern.permute.xlu0 5
    %1256 = vperm.xlu0 %1255, %v604
    %v1257 = vpop.permute.xlu0 %1256
    %vm1258 = vcmp.eq.s32.totalorder %v1257, 1
    %v1259 = vsel %vm1258, %v1252, %v1129
    %v1260 = vsel %vm1258, %v1254, %v1130
    %v1261 = vld [vmem:[#allocation2 + $0xc0] sm:$0xff]
    %v1262 = vld [vmem:[#allocation2 + $0xc8] sm:$0xff]
    %v1263 = vld [vmem:[#allocation2 + $0xd0] sm:$0xff]
    %v1264 = vld [vmem:[#allocation2 + $0xd8] sm:$0xff]
    %v1265 = vpack.c.bf16 %v1260, %v1260
    %1266 = vmatpush.bf16.msra.mxu0 %v449
    %1267 = vmatpush.bf16.msra.mxu0 %v445
    %1268 = vmatpush.bf16.msra.mxu0 %v441
    %1269 = vmatpush.bf16.msra.mxu0 %v437
    %1270 = vmatpush.bf16.msra.mxu0 %v433
    %1271 = vmatpush.bf16.msra.mxu0 %v429
    %1272 = vmatpush.bf16.msra.mxu0 %v425
    %1273 = vmatpush.bf16.msra.mxu0 %v421
    %1274 = vmatmul.bf16.gmra.mxu0 %v1265
    %v1275 = vpop.f32.mrf.mxu0
    %v1276 = vadd.f32 0.0, %v1275
    %v1277 = vpop.f32.mrf.mxu0
    %1278 = vdwg.mxu0
    %1279 = vmatpush.bf16.msra.mxu0 %v450
    %1280 = vmatpush.bf16.msra.mxu0 %v446
    %1281 = vmatpush.bf16.msra.mxu0 %v442
    %1282 = vmatpush.bf16.msra.mxu0 %v438
    %1283 = vmatpush.bf16.msra.mxu0 %v434
    %1284 = vmatpush.bf16.msra.mxu0 %v430
    %1285 = vmatpush.bf16.msra.mxu0 %v426
    %1286 = vmatpush.bf16.msra.mxu0 %v422
    %1287 = vmatmul.bf16.gmra.mxu0 %v1265
    %v1288 = vpop.f32.mrf.mxu0
    %v1289 = vadd.f32 0.0, %v1288
    %v1290 = vpop.f32.mrf.mxu0
    %1291 = vdwg.mxu0
    %1292 = vmatpush.bf16.msra.mxu0 %v451
    %1293 = vmatpush.bf16.msra.mxu0 %v447
    %1294 = vmatpush.bf16.msra.mxu0 %v443
    %1295 = vmatpush.bf16.msra.mxu0 %v439
    %1296 = vmatpush.bf16.msra.mxu0 %v435
    %1297 = vmatpush.bf16.msra.mxu0 %v431
    %1298 = vmatpush.bf16.msra.mxu0 %v427
    %1299 = vmatpush.bf16.msra.mxu0 %v423
    %1300 = vmatmul.bf16.gmra.mxu0 %v1265
    %v1301 = vpop.f32.mrf.mxu0
    %v1302 = vadd.f32 0.0, %v1301
    %v1303 = vpop.f32.mrf.mxu0
    %1304 = vdwg.mxu0
    %1305 = vmatpush.bf16.msra.mxu0 %v452
    %1306 = vmatpush.bf16.msra.mxu0 %v448
    %1307 = vmatpush.bf16.msra.mxu0 %v444
    %1308 = vmatpush.bf16.msra.mxu0 %v440
    %1309 = vmatpush.bf16.msra.mxu0 %v436
    %1310 = vmatpush.bf16.msra.mxu0 %v432
    %1311 = vmatpush.bf16.msra.mxu0 %v428
    %1312 = vmatpush.bf16.msra.mxu0 %v424
    %1313 = vmatmul.bf16.gmra.mxu0 %v1265
    %v1314 = vpop.f32.mrf.mxu0
    %v1315 = vadd.f32 0.0, %v1314
    %v1316 = vpop.f32.mrf.mxu0
    %1317 = vdwg.mxu0
    %v1318 = vadd.f32 %v1261, %v1276
    %v1319 = vadd.f32 %v1262, %v1289
    %v1320 = vadd.f32 %v1263, %v1302
    %v1321 = vadd.f32 %v1264, %v1315
    %v1322 = vxor.u32 %v1318, 2147483648
    %v1323 = vxor.u32 %v1319, 2147483648
    %v1324 = vxor.u32 %v1320, 2147483648
    %v1325 = vmul.f32 %v1322, 1.442695
    %v1326 = vpow.pop %v1325
    %v1327 = vmul.f32 %v1323, 1.442695
    %v1328 = vpow.pop %v1327
    %v1329 = vmul.f32 %v1324, 1.442695
    %v1330 = vpow.pop %v1329
    %v1331 = vadd.f32 %v1326, 1.0
    %v1332 = vadd.f32 %v1328, 1.0
    %v1333 = vadd.f32 %v1330, 1.0
    %v1334 = vrcp.pop %v1331
    %v1335 = vmul.f32 %v1331, %v1334
    %v1336 = vsub.f32 1.0, %v1335
    %v1337 = vmul.f32 %v1334, %v1336
    %v1338 = vadd.f32 %v1334, %v1337
    %vm1339 = vweird.f32 %v1331
    %vm1340 = vweird.f32 %v1334
    %vm1341 = vmor %vm1339, %vm1340
    %v1342 = vsel %vm1341, %v1334, %v1338
    %v1343 = vand.u32 2147483647, %v1331
    %vm1344 = vcmp.eq.f32.partialorder %v1343, 8.507059e+37
    %v1345 = vand.u32 %v1331, 2147483648
    %v1346 = vor.u32 1.1754944e-38, %v1345
    %v1347 = vsel %vm1344, %v1346, %v1342
    %v1348 = vmul.f32 1.0, %v1347
    %v1349 = vrcp.pop %v1332
    %v1350 = vmul.f32 %v1332, %v1349
    %v1351 = vsub.f32 1.0, %v1350
    %v1352 = vmul.f32 %v1349, %v1351
    %v1353 = vadd.f32 %v1349, %v1352
    %vm1354 = vweird.f32 %v1332
    %vm1355 = vweird.f32 %v1349
    %vm1356 = vmor %vm1354, %vm1355
    %v1357 = vsel %vm1356, %v1349, %v1353
    %v1358 = vand.u32 2147483647, %v1332
    %vm1359 = vcmp.eq.f32.partialorder %v1358, 8.507059e+37
    %v1360 = vand.u32 %v1332, 2147483648
    %v1361 = vor.u32 1.1754944e-38, %v1360
    %v1362 = vsel %vm1359, %v1361, %v1357
    %v1363 = vmul.f32 1.0, %v1362
    %v1364 = vrcp.pop %v1333
    %v1365 = vmul.f32 %v1333, %v1364
    %v1366 = vsub.f32 1.0, %v1365
    %v1367 = vmul.f32 %v1364, %v1366
    %v1368 = vadd.f32 %v1364, %v1367
    %vm1369 = vweird.f32 %v1333
    %vm1370 = vweird.f32 %v1364
    %vm1371 = vmor %vm1369, %vm1370
    %v1372 = vsel %vm1371, %v1364, %v1368
    %v1373 = vand.u32 2147483647, %v1333
    %vm1374 = vcmp.eq.f32.partialorder %v1373, 8.507059e+37
    %v1375 = vand.u32 %v1333, 2147483648
    %v1376 = vor.u32 1.1754944e-38, %v1375
    %v1377 = vsel %vm1374, %v1376, %v1372
    %v1378 = vmul.f32 1.0, %v1377
    %v1379 = vtanh.pop %v1321
    %v1380 = vmul.f32 %v1363, %v1259
    %v1381 = vmul.f32 %v1348, %v1379
    %v1382 = vadd.f32 %v1380, %v1381
    %v1383 = vtanh.pop %v1382
    %v1384 = vmul.f32 %v1378, %v1383
    %1385 = vset.pattern.permute.xlu0 6
    %1386 = vperm.xlu0 %1385, %v604
    %v1387 = vpop.permute.xlu0 %1386
    %vm1388 = vcmp.eq.s32.totalorder %v1387, 1
    %v1389 = vsel %vm1388, %v1382, %v1259
    %v1390 = vsel %vm1388, %v1384, %v1260
    %v1391 = vld [vmem:[#allocation2 + $0xe0] sm:$0xff]
    %v1392 = vld [vmem:[#allocation2 + $0xe8] sm:$0xff]
    %v1393 = vld [vmem:[#allocation2 + $0xf0] sm:$0xff]
    %v1394 = vld [vmem:[#allocation2 + $0xf8] sm:$0xff]
    %v1395 = vpack.c.bf16 %v1390, %v1390
    %1396 = vmatpush.bf16.msra.mxu0 %v449
    %1397 = vmatpush.bf16.msra.mxu0 %v445
    %1398 = vmatpush.bf16.msra.mxu0 %v441
    %1399 = vmatpush.bf16.msra.mxu0 %v437
    %1400 = vmatpush.bf16.msra.mxu0 %v433
    %1401 = vmatpush.bf16.msra.mxu0 %v429
    %1402 = vmatpush.bf16.msra.mxu0 %v425
    %1403 = vmatpush.bf16.msra.mxu0 %v421
    %1404 = vmatmul.bf16.gmra.mxu0 %v1395
    %v1405 = vpop.f32.mrf.mxu0
    %v1406 = vadd.f32 0.0, %v1405
    %v1407 = vpop.f32.mrf.mxu0
    %1408 = vdwg.mxu0
    %1409 = vmatpush.bf16.msra.mxu0 %v450
    %1410 = vmatpush.bf16.msra.mxu0 %v446
    %1411 = vmatpush.bf16.msra.mxu0 %v442
    %1412 = vmatpush.bf16.msra.mxu0 %v438
    %1413 = vmatpush.bf16.msra.mxu0 %v434
    %1414 = vmatpush.bf16.msra.mxu0 %v430
    %1415 = vmatpush.bf16.msra.mxu0 %v426
    %1416 = vmatpush.bf16.msra.mxu0 %v422
    %1417 = vmatmul.bf16.gmra.mxu0 %v1395
    %v1418 = vpop.f32.mrf.mxu0
    %v1419 = vadd.f32 0.0, %v1418
    %v1420 = vpop.f32.mrf.mxu0
    %1421 = vdwg.mxu0
    %1422 = vmatpush.bf16.msra.mxu0 %v451
    %1423 = vmatpush.bf16.msra.mxu0 %v447
    %1424 = vmatpush.bf16.msra.mxu0 %v443
    %1425 = vmatpush.bf16.msra.mxu0 %v439
    %1426 = vmatpush.bf16.msra.mxu0 %v435
    %1427 = vmatpush.bf16.msra.mxu0 %v431
    %1428 = vmatpush.bf16.msra.mxu0 %v427
    %1429 = vmatpush.bf16.msra.mxu0 %v423
    %1430 = vmatmul.bf16.gmra.mxu0 %v1395
    %v1431 = vpop.f32.mrf.mxu0
    %v1432 = vadd.f32 0.0, %v1431
    %v1433 = vpop.f32.mrf.mxu0
    %1434 = vdwg.mxu0
    %1435 = vmatpush.bf16.msra.mxu0 %v452
    %1436 = vmatpush.bf16.msra.mxu0 %v448
    %1437 = vmatpush.bf16.msra.mxu0 %v444
    %1438 = vmatpush.bf16.msra.mxu0 %v440
    %1439 = vmatpush.bf16.msra.mxu0 %v436
    %1440 = vmatpush.bf16.msra.mxu0 %v432
    %1441 = vmatpush.bf16.msra.mxu0 %v428
    %1442 = vmatpush.bf16.msra.mxu0 %v424
    %1443 = vmatmul.bf16.gmra.mxu0 %v1395
    %v1444 = vpop.f32.mrf.mxu0
    %v1445 = vadd.f32 0.0, %v1444
    %v1446 = vpop.f32.mrf.mxu0
    %1447 = vdwg.mxu0
    %v1448 = vadd.f32 %v1391, %v1406
    %v1449 = vadd.f32 %v1392, %v1419
    %v1450 = vadd.f32 %v1393, %v1432
    %v1451 = vadd.f32 %v1394, %v1445
    %v1452 = vxor.u32 %v1448, 2147483648
    %v1453 = vxor.u32 %v1449, 2147483648
    %v1454 = vxor.u32 %v1450, 2147483648
    %v1455 = vmul.f32 %v1452, 1.442695
    %v1456 = vpow.pop %v1455
    %v1457 = vmul.f32 %v1453, 1.442695
    %v1458 = vpow.pop %v1457
    %v1459 = vmul.f32 %v1454, 1.442695
    %v1460 = vpow.pop %v1459
    %v1461 = vadd.f32 %v1456, 1.0
    %v1462 = vadd.f32 %v1458, 1.0
    %v1463 = vadd.f32 %v1460, 1.0
    %v1464 = vrcp.pop %v1461
    %v1465 = vmul.f32 %v1461, %v1464
    %v1466 = vsub.f32 1.0, %v1465
    %v1467 = vmul.f32 %v1464, %v1466
    %v1468 = vadd.f32 %v1464, %v1467
    %vm1469 = vweird.f32 %v1461
    %vm1470 = vweird.f32 %v1464
    %vm1471 = vmor %vm1469, %vm1470
    %v1472 = vsel %vm1471, %v1464, %v1468
    %v1473 = vand.u32 2147483647, %v1461
    %vm1474 = vcmp.eq.f32.partialorder %v1473, 8.507059e+37
    %v1475 = vand.u32 %v1461, 2147483648
    %v1476 = vor.u32 1.1754944e-38, %v1475
    %v1477 = vsel %vm1474, %v1476, %v1472
    %v1478 = vmul.f32 1.0, %v1477
    %v1479 = vrcp.pop %v1462
    %v1480 = vmul.f32 %v1462, %v1479
    %v1481 = vsub.f32 1.0, %v1480
    %v1482 = vmul.f32 %v1479, %v1481
    %v1483 = vadd.f32 %v1479, %v1482
    %vm1484 = vweird.f32 %v1462
    %vm1485 = vweird.f32 %v1479
    %vm1486 = vmor %vm1484, %vm1485
    %v1487 = vsel %vm1486, %v1479, %v1483
    %v1488 = vand.u32 2147483647, %v1462
    %vm1489 = vcmp.eq.f32.partialorder %v1488, 8.507059e+37
    %v1490 = vand.u32 %v1462, 2147483648
    %v1491 = vor.u32 1.1754944e-38, %v1490
    %v1492 = vsel %vm1489, %v1491, %v1487
    %v1493 = vmul.f32 1.0, %v1492
    %v1494 = vrcp.pop %v1463
    %v1495 = vmul.f32 %v1463, %v1494
    %v1496 = vsub.f32 1.0, %v1495
    %v1497 = vmul.f32 %v1494, %v1496
    %v1498 = vadd.f32 %v1494, %v1497
    %vm1499 = vweird.f32 %v1463
    %vm1500 = vweird.f32 %v1494
    %vm1501 = vmor %vm1499, %vm1500
    %v1502 = vsel %vm1501, %v1494, %v1498
    %v1503 = vand.u32 2147483647, %v1463
    %vm1504 = vcmp.eq.f32.partialorder %v1503, 8.507059e+37
    %v1505 = vand.u32 %v1463, 2147483648
    %v1506 = vor.u32 1.1754944e-38, %v1505
    %v1507 = vsel %vm1504, %v1506, %v1502
    %v1508 = vmul.f32 1.0, %v1507
    %v1509 = vtanh.pop %v1451
    %v1510 = vmul.f32 %v1493, %v1389
    %v1511 = vmul.f32 %v1478, %v1509
    %v1512 = vadd.f32 %v1510, %v1511
    %v1513 = vtanh.pop %v1512
    %v1514 = vmul.f32 %v1508, %v1513
    %1515 = vset.pattern.permute.xlu0 7
    %1516 = vperm.xlu0 %1515, %v604
    %v1517 = vpop.permute.xlu0 %1516
    %vm1518 = vcmp.eq.s32.totalorder %v1517, 1
    %v1519 = vsel %vm1518, %v1514, %v1390
    %v1520 = vld [vmem:[%s5] sm:$0xff]
    %v1521 = vld [vmem:[%s5 + $0x8] sm:$0xff]
    %v1522 = vld [vmem:[%s5 + $0x10] sm:$0xff]
    %v1523 = vld [vmem:[%s5 + $0x18] sm:$0xff]
    %v1524 = vld [vmem:[%s5 + $0x20] sm:$0xff]
    %v1525 = vld [vmem:[%s5 + $0x28] sm:$0xff]
    %v1526 = vld [vmem:[%s5 + $0x30] sm:$0xff]
    %v1527 = vld [vmem:[%s5 + $0x38] sm:$0xff]
    %v1528 = vld [vmem:[%s5 + $0x40] sm:$0xff]
    %v1529 = vld [vmem:[%s5 + $0x48] sm:$0xff]
    %v1530 = vld [vmem:[%s5 + $0x50] sm:$0xff]
    %v1531 = vld [vmem:[%s5 + $0x58] sm:$0xff]
    %v1532 = vld [vmem:[%s5 + $0x60] sm:$0xff]
    %v1533 = vld [vmem:[%s5 + $0x68] sm:$0xff]
    %v1534 = vld [vmem:[%s5 + $0x70] sm:$0xff]
    %v1535 = vld [vmem:[%s5 + $0x78] sm:$0xff]
    %v1536 = vld [vmem:[%s6] sm:$0x1]
    %v1538 = vperm.slane %v1536, 0
    %1540 = vmatpush.msra.mxu0 %v1535
    %1541 = vmatpush.msra.mxu0 %v1534
    %1542 = vmatpush.msra.mxu0 %v1533
    %1543 = vmatpush.msra.mxu0 %v1532
    %1544 = vmatpush.msra.mxu0 %v1531
    %1545 = vmatpush.msra.mxu0 %v1530
    %1546 = vmatpush.msra.mxu0 %v1529
    %1547 = vmatpush.msra.mxu0 %v1528
    %1548 = vmatpush.msra.mxu0 %v1527
    %1549 = vmatpush.msra.mxu0 %v1526
    %1550 = vmatpush.msra.mxu0 %v1525
    %1551 = vmatpush.msra.mxu0 %v1524
    %1552 = vmatpush.msra.mxu0 %v1523
    %1553 = vmatpush.msra.mxu0 %v1522
    %1554 = vmatpush.msra.mxu0 %v1521
    %1555 = vmatpush.msra.mxu0 %v1520
    %1556 = vmatmul.f32.gmra.mxu0 %v1519
    %v1557 = vpop.f32.mrf.mxu0
    %v1558 = vadd.f32 %v1538, %v1557
    %1559 = vdwg.mxu0
    %1560 = vst [vmem:[%s7] sm:$0xff] %v1558
    // Predicated region
    $region38: #{test1_forward.1} parent=1 // pred_check
      _
    $region39: #{test1_forward.1} parent=1 // pred_check_branch
      %1562 = sbr.rel (0) target = $region41
    $region40: #{test1_forward.1} parent=1 // pred_region
      _
    $region41: #{test1_forward.1} parent=1 // pred_fallthru
      _
    // Predicated region
    $region42: #{test1_forward.1} parent=1 // pred_check
      _
    $region43: #{test1_forward.1} parent=1 // pred_check_branch
      %1564 = sbr.rel (0) target = $region45
    $region44: #{test1_forward.1} parent=1 // pred_region
      _
    $region45: #{test1_forward.1} parent=1 // pred_fallthru
      _
    %1565 = vsyncpa [#allocation4], 1
    %1566 = vsyncpa [#allocation6], 1

</llo_original>
